<compile_context>
chip_gen: v7x
topology: tpu7x:2x2x1
jax: 0.10.0
libtpu: 0.0.40
codegen_flags: <defaults>
</compile_context>

<pallas_src>
import functools
import math

import jax
import jax.numpy as jnp
import numpy as np
from jax.experimental import pallas as pl
from jax.experimental.pallas import tpu as pltpu

EPS = 1e-5  # nn.LayerNorm default


def _patch_merge_kernel(x_ref, w0_ref, w1_ref, cs_ref, b_ref, o_ref, *, precision):
    # x_ref : (TR, 2, WO, 2C) raw pixel rows; axis 1 is the h-parity, the last
    #         axis packs (w-parity, c) contiguously.
    # w0_ref: (2C, O)  gamma-folded reduction rows for the even-h half (x0, x2)
    # w1_ref: (2C, O)  gamma-folded reduction rows for the odd-h half  (x1, x3)
    # cs_ref: (1, O)   colsum = ones(4C) @ (gamma[:,None] * W)
    # b_ref : (1, O)   bias   = beta @ W
    # o_ref : (TR*WO, O) flat output tokens
    tr, _, wo, c2 = x_ref.shape
    nt = tr * wo
    inv_4c = 1.0 / (2.0 * c2)                       # 1 / (4*C)

    h0 = x_ref[:, 0, :, :].reshape(nt, c2)          # even-h tokens (raw dtype)
    h1 = x_ref[:, 1, :, :].reshape(nt, c2)          # odd-h tokens

    # LayerNorm statistics in f32 (two-pass variance, order-invariant over 4C).
    h0f = h0.astype(jnp.float32)
    h1f = h1.astype(jnp.float32)
    mean = (jnp.sum(h0f, axis=-1, keepdims=True)
            + jnp.sum(h1f, axis=-1, keepdims=True)) * inv_4c
    d0 = h0f - mean
    d1 = h1f - mean
    var = (jnp.sum(d0 * d0, axis=-1, keepdims=True)
           + jnp.sum(d1 * d1, axis=-1, keepdims=True)) * inv_4c
    inv = jax.lax.rsqrt(var + EPS)

    # Raw-operand MXU matmuls; LayerNorm correction folded in afterwards:
    #   y = inv * (h0 @ w0 + h1 @ w1 - mean * colsum) + bias
    acc = jnp.dot(h0.astype(w0_ref.dtype), w0_ref[...],
                  preferred_element_type=jnp.float32, precision=precision)
    acc = acc + jnp.dot(h1.astype(w1_ref.dtype), w1_ref[...],
                        preferred_element_type=jnp.float32, precision=precision)
    y = inv * (acc - mean * cs_ref[...]) + b_ref[...]
    o_ref[...] = y.astype(o_ref.dtype)


def _pick_rows_per_step(R, Wo, row_bytes, target_tokens, max_block_bytes):
    """Rows (r = b*Ho + ho) of the raw-row view processed per grid step."""
    cap_rows = max(1, max_block_bytes // row_bytes)       # VMEM block budget
    tgt_rows = max(1, target_tokens // Wo)                # ~target tokens/step
    floor_rows = max(1, -(-64 // Wo))                     # >= ~64 tokens/step
    tr = min(R, cap_rows, tgt_rows)
    if R >= 4:                                            # >=4 steps: both v7x TCs + pipelining
        tr = min(tr, max(floor_rows, R // 4))
    tr = max(tr, min(R, cap_rows, floor_rows))
    if tr >= R:
        return R                                          # single full-dim block (always legal)
    m8 = 8 // math.gcd(Wo, 8)                             # (tr*Wo) % 8 == 0 for the out block
    tr = max(m8, (tr // m8) * m8)
    return min(tr, R)


def patch_merging_2d(x, gamma, beta, w_red, *, compute_dtype=None, target_tokens=None):
    """PatchMerging2D forward: (B, H, W, C) -> (B, H//2, W//2, 2C).

    gamma, beta: (4C,) LayerNorm affine params (torch channel order
                 [x0, x1, x2, x3] = [(h0,w0), (h1,w0), (h0,w1), (h1,w1)]).
    w_red:       (4C, 2C) == nn.Linear(4C, 2C, bias=False).weight.T.
    """
    B, H, W, C = x.shape
    assert H % 2 == 0 and W % 2 == 0, "even-resolution path only"
    # TODO(synk): odd-resolution SHAPE_FIX truncation path of the PyTorch module
    # is not implemented.
    Ho, Wo = H // 2, W // 2
    C2, C4 = 2 * C, 4 * C
    O = w_red.shape[-1]
    assert w_red.shape == (C4, O) and gamma.shape == (C4,) and beta.shape == (C4,)

    # Free HBM view: element [r, p1, wo, p2*C + c] == x[b, 2*ho+p1, 2*wo+p2, c]
    # with r = b*Ho + ho, so the 2x2 gather rides the kernel's own blocked DMA.
    R = B * Ho
    xv = x.reshape(R, 2, Wo, C2)

    # Fold the LayerNorm affine into the projection and permute the 4C rows from
    # torch concat order [x0,x1,x2,x3] into raw (h-parity, w-parity, c) order,
    # split into the even-h / odd-h halves used by the two matmuls.
    gamma_f = gamma.astype(jnp.float32)
    beta_f = beta.astype(jnp.float32)
    w_f = w_red.astype(jnp.float32)
    w_aff = gamma_f[:, None] * w_f                                       # (4C, O)
    w0 = jnp.concatenate([w_aff[0:C], w_aff[2 * C:3 * C]], axis=0)       # even-h rows: x0, x2
    w1 = jnp.concatenate([w_aff[C:2 * C], w_aff[3 * C:4 * C]], axis=0)   # odd-h rows:  x1, x3
    colsum = jnp.sum(w_aff, axis=0)[None, :]                             # (1, O) f32
    bias = (beta_f @ w_f)[None, :]                                       # (1, O) f32

    # Compute dtype of the reduction matmuls (stats / accumulation stay f32).
    if compute_dtype is None:
        compute_dtype = jnp.bfloat16 if x.dtype == jnp.bfloat16 else jnp.float32
    compute_dtype = np.dtype(compute_dtype)
    w0 = w0.astype(compute_dtype)
    w1 = w1.astype(compute_dtype)
    precision = (jax.lax.Precision.HIGHEST
                 if compute_dtype == np.dtype(np.float32)
                 else jax.lax.Precision.DEFAULT)
    # TODO(synk): optional single K=4C matmul variant for v5e's 128-wide MXU if
    # profiling ever shows the two K=2C dots exposed there.

    # Generation-aware tile / VMEM budget (v7x: 64 MiB VMEM per TC; v5e/v6e: 128).
    try:
        vmem_cap = int(pltpu.get_tpu_info().vmem_capacity_bytes)
    except Exception:  # non-TPU trace / older runtime: assume 128 MiB generations
        vmem_cap = 128 << 20
    small_vmem = vmem_cap <= (64 << 20)
    max_block_bytes = (3 << 20) if small_vmem else (8 << 20)
    vmem_ceiling = min(96 << 20, (3 * vmem_cap) // 4)
    if target_tokens is None:
        target_tokens = 1024 if small_vmem else 2048

    itemsize = np.dtype(x.dtype).itemsize
    row_bytes = 2 * Wo * C2 * itemsize                   # one r-row of the view
    tr = _pick_rows_per_step(R, Wo, row_bytes, target_tokens, max_block_bytes)
    nt = tr * Wo

    # Scoped-VMEM request: double-buffered in/out blocks, resident weights, and
    # the f32 intermediates live inside one step, plus slack.
    in_block = tr * row_bytes
    out_block = nt * O * itemsize
    w_bytes = 2 * C2 * O * compute_dtype.itemsize + 2 * O * 4
    f32_tmp = nt * (2 * C2 + O) * 4 + 2 * nt * C2 * compute_dtype.itemsize
    vmem_limit = 2 * (in_block + out_block) + 2 * w_bytes + f32_tmp + (2 << 20)
    vmem_limit = int(min(max(vmem_limit, 16 << 20), vmem_ceiling))

    out2d = pl.pallas_call(
        functools.partial(_patch_merge_kernel, precision=precision),
        out_shape=jax.ShapeDtypeStruct((R * Wo, O), x.dtype),
        grid_spec=pltpu.PrefetchScalarGridSpec(
            num_scalar_prefetch=0,
            grid=(pl.cdiv(R, tr),),
            in_specs=[
                pl.BlockSpec((tr, 2, Wo, C2), lambda i: (i, 0, 0, 0)),  # raw rows
                pl.BlockSpec((C2, O), lambda i: (0, 0)),                # w even-h
                pl.BlockSpec((C2, O), lambda i: (0, 0)),                # w odd-h
                pl.BlockSpec((1, O), lambda i: (0, 0)),                 # colsum
                pl.BlockSpec((1, O), lambda i: (0, 0)),                 # folded bias
            ],
            out_specs=pl.BlockSpec((tr * Wo, O), lambda i: (i, 0)),     # flat tokens
        ),
        compiler_params=pltpu.CompilerParams(
            dimension_semantics=("parallel",),
            vmem_limit_bytes=vmem_limit,
        ),
    )(xv, w0, w1, colsum, bias)

    return out2d.reshape(B, Ho, Wo, O)   # free metadata reshape


def _reference(x, gamma, beta, w_red):
    x0 = x[:, 0::2, 0::2, :]
    x1 = x[:, 1::2, 0::2, :]
    x2 = x[:, 0::2, 1::2, :]
    x3 = x[:, 1::2, 1::2, :]
    xm = jnp.concatenate([x0, x1, x2, x3], axis=-1).astype(jnp.float32)
    mean = jnp.mean(xm, axis=-1, keepdims=True)
    var = jnp.mean((xm - mean) ** 2, axis=-1, keepdims=True)
    xn = (xm - mean) * jax.lax.rsqrt(var + EPS) * gamma.astype(jnp.float32) \
         + beta.astype(jnp.float32)
    return jnp.einsum("bhwc,cd->bhwd", xn, w_red.astype(jnp.float32),
                      precision=jax.lax.Precision.HIGHEST)


if __name__ == "__main__":
    B, H, W, dim = 2, 16, 16, 32          # x: (2, 16, 16, 32); 4*dim=128, 2*dim=64
    key = jax.random.PRNGKey(0)
    kx, kw, kg, kb = jax.random.split(key, 4)

    x = jax.random.normal(kx, (B, H, W, dim), dtype=jnp.float32)
    # deterministic synthetic params (shapes from the module's __init__)
    w_red = jax.random.normal(kw, (4 * dim, 2 * dim), dtype=jnp.float32) * 0.02
    gamma = jnp.ones((4 * dim,), jnp.float32) + 0.01 * jax.random.normal(kg, (4 * dim,))
    beta = 0.01 * jax.random.normal(kb, (4 * dim,))

    y = patch_merging_2d(x, gamma, beta, w_red)
    y = jax.block_until_ready(y)

    y_ref = _reference(x, gamma, beta, w_red)
    assert y.shape == (B, H // 2, W // 2, 2 * dim), y.shape
    # f32 path runs the MXU at Precision.HIGHEST; 2e-4 covers the algebraic
    # reassociation of folding the LayerNorm correction behind the matmul.
    assert jnp.allclose(y, y_ref, atol=2e-4, rtol=2e-4), "mismatch vs reference"
    print("KERNEL_OK")
</pallas_src>

<mosaic_0001>
module attributes {stable_mosaic.version = 11 : i64} {
  func.func @_patch_merge_kernel(%arg0: i32, %arg1: memref<8x2x8x64xf32, #tpu.memory_space<vmem>>, %arg2: memref<64x64xf32, #tpu.memory_space<vmem>>, %arg3: memref<64x64xf32, #tpu.memory_space<vmem>>, %arg4: memref<1x64xf32, #tpu.memory_space<vmem>>, %arg5: memref<1x64xf32, #tpu.memory_space<vmem>>, %arg6: memref<64x64xf32, #tpu.memory_space<vmem>>) attributes {dimension_semantics = [#tpu.dimension_semantics<parallel>], iteration_bounds = array<i64: 2>, scalar_prefetch = 0 : i64, scratch_operands = 0 : i64, tpu.core_type = #tpu.core_type<tc>, window_params = [{transform_indices = @transform_0, window_bounds = array<i64: 8, 2, 8, 64>}, {pipeline_mode = #tpu.pipeline_mode<synchronous>, transform_indices = @transform_1, window_bounds = array<i64: 64, 64>}, {pipeline_mode = #tpu.pipeline_mode<synchronous>, transform_indices = @transform_2, window_bounds = array<i64: 64, 64>}, {pipeline_mode = #tpu.pipeline_mode<synchronous>, transform_indices = @transform_3, window_bounds = array<i64: 1, 64>}, {pipeline_mode = #tpu.pipeline_mode<synchronous>, transform_indices = @transform_4, window_bounds = array<i64: 1, 64>}, {transform_indices = @transform_5, window_bounds = array<i64: 64, 64>}]} {
    %c0 = arith.constant 0 : index
    %c0_0 = arith.constant 0 : index
    %c0_1 = arith.constant 0 : index
    %c0_2 = arith.constant 0 : index
    %0 = vector.load %arg1[%c0, %c0_0, %c0_1, %c0_2] : memref<8x2x8x64xf32, #tpu.memory_space<vmem>>, vector<8x1x8x64xf32>
    %1 = vector.shape_cast %0 : vector<8x1x8x64xf32> to vector<8x8x64xf32>
    %2 = vector.shape_cast %1 : vector<8x8x64xf32> to vector<64x64xf32>
    %c0_3 = arith.constant 0 : index
    %c1 = arith.constant 1 : index
    %c0_4 = arith.constant 0 : index
    %c0_5 = arith.constant 0 : index
    %3 = vector.load %arg1[%c0_3, %c1, %c0_4, %c0_5] : memref<8x2x8x64xf32, #tpu.memory_space<vmem>>, vector<8x1x8x64xf32>
    %4 = vector.shape_cast %3 : vector<8x1x8x64xf32> to vector<8x8x64xf32>
    %5 = vector.shape_cast %4 : vector<8x8x64xf32> to vector<64x64xf32>
    %cst = arith.constant dense<0.000000e+00> : vector<64xf32>
    %6 = vector.multi_reduction <add>, %2, %cst [1] : vector<64x64xf32> to vector<64xf32>
    %7 = vector.shape_cast %6 : vector<64xf32> to vector<64x1xf32>
    %cst_6 = arith.constant dense<0.000000e+00> : vector<64xf32>
    %8 = vector.multi_reduction <add>, %5, %cst_6 [1] : vector<64x64xf32> to vector<64xf32>
    %9 = vector.shape_cast %8 : vector<64xf32> to vector<64x1xf32>
    %10 = arith.addf %7, %9 : vector<64x1xf32>
    %cst_7 = arith.constant 7.812500e-03 : f32
    %11 = vector.broadcast %cst_7 : f32 to vector<64x1xf32>
    %12 = arith.mulf %10, %11 : vector<64x1xf32>
    %13 = vector.broadcast %12 : vector<64x1xf32> to vector<64x64xf32>
    %14 = arith.subf %2, %13 : vector<64x64xf32>
    %15 = vector.broadcast %12 : vector<64x1xf32> to vector<64x64xf32>
    %16 = arith.subf %5, %15 : vector<64x64xf32>
    %17 = arith.mulf %14, %14 : vector<64x64xf32>
    %cst_8 = arith.constant dense<0.000000e+00> : vector<64xf32>
    %18 = vector.multi_reduction <add>, %17, %cst_8 [1] : vector<64x64xf32> to vector<64xf32>
    %19 = vector.shape_cast %18 : vector<64xf32> to vector<64x1xf32>
    %20 = arith.mulf %16, %16 : vector<64x64xf32>
    %cst_9 = arith.constant dense<0.000000e+00> : vector<64xf32>
    %21 = vector.multi_reduction <add>, %20, %cst_9 [1] : vector<64x64xf32> to vector<64xf32>
    %22 = vector.shape_cast %21 : vector<64xf32> to vector<64x1xf32>
    %23 = arith.addf %19, %22 : vector<64x1xf32>
    %cst_10 = arith.constant 7.812500e-03 : f32
    %24 = vector.broadcast %cst_10 : f32 to vector<64x1xf32>
    %25 = arith.mulf %23, %24 : vector<64x1xf32>
    %cst_11 = arith.constant 9.99999974E-6 : f32
    %26 = vector.broadcast %cst_11 : f32 to vector<64x1xf32>
    %27 = arith.addf %25, %26 : vector<64x1xf32>
    %28 = math.rsqrt %27 : vector<64x1xf32>
    %c0_12 = arith.constant 0 : index
    %c0_13 = arith.constant 0 : index
    %29 = vector.load %arg2[%c0_12, %c0_13] : memref<64x64xf32, #tpu.memory_space<vmem>>, vector<64x64xf32>
    %cst_14 = arith.constant dense<0.000000e+00> : vector<64x64xf32>
    %30 = tpu.matmul %2, %29, %cst_14 {dimension_numbers = #tpu.dot_dimension_numbers<[1], [0], [0], [1], [0, 0, 1, 1], [], []>, precision = #tpu.contract_precision<fp32>} : vector<64x64xf32>, vector<64x64xf32>, vector<64x64xf32> -> vector<64x64xf32>
    %c0_15 = arith.constant 0 : index
    %c0_16 = arith.constant 0 : index
    %31 = vector.load %arg3[%c0_15, %c0_16] : memref<64x64xf32, #tpu.memory_space<vmem>>, vector<64x64xf32>
    %cst_17 = arith.constant dense<0.000000e+00> : vector<64x64xf32>
    %32 = tpu.matmul %5, %31, %cst_17 {dimension_numbers = #tpu.dot_dimension_numbers<[1], [0], [0], [1], [0, 0, 1, 1], [], []>, precision = #tpu.contract_precision<fp32>} : vector<64x64xf32>, vector<64x64xf32>, vector<64x64xf32> -> vector<64x64xf32>
    %33 = arith.addf %30, %32 : vector<64x64xf32>
    %c0_18 = arith.constant 0 : index
    %c0_19 = arith.constant 0 : index
    %34 = vector.load %arg4[%c0_18, %c0_19] : memref<1x64xf32, #tpu.memory_space<vmem>>, vector<1x64xf32>
    %35 = vector.broadcast %12 : vector<64x1xf32> to vector<64x64xf32>
    %36 = vector.broadcast %34 : vector<1x64xf32> to vector<64x64xf32>
    %37 = arith.mulf %35, %36 : vector<64x64xf32>
    %38 = arith.subf %33, %37 : vector<64x64xf32>
    %39 = vector.broadcast %28 : vector<64x1xf32> to vector<64x64xf32>
    %40 = arith.mulf %39, %38 : vector<64x64xf32>
    %c0_20 = arith.constant 0 : index
    %c0_21 = arith.constant 0 : index
    %41 = vector.load %arg5[%c0_20, %c0_21] : memref<1x64xf32, #tpu.memory_space<vmem>>, vector<1x64xf32>
    %42 = vector.broadcast %41 : vector<1x64xf32> to vector<64x64xf32>
    %43 = arith.addf %40, %42 : vector<64x64xf32>
    %c0_22 = arith.constant 0 : index
    %c0_23 = arith.constant 0 : index
    %44 = vector.load %arg6[%c0_22, %c0_23] : memref<64x64xf32, #tpu.memory_space<vmem>>, vector<64x64xf32>
    tpu.vector_store %arg6[%c0_22, %c0_23], %43 {strides = array<i32>} : memref<64x64xf32, #tpu.memory_space<vmem>>, vector<64x64xf32>,
    return
  }
  func.func @transform_0(%arg0: i32) -> (i32, i32, i32, i32) {
    %c0_i32 = arith.constant 0 : i32
    %c0_i32_0 = arith.constant 0 : i32
    %c0_i32_1 = arith.constant 0 : i32
    %c0_i32_2 = arith.constant 0 : i32
    return %arg0, %c0_i32, %c0_i32_0, %c0_i32_1 : i32, i32, i32, i32
  }
  func.func @transform_1(%arg0: i32) -> (i32, i32) {
    %c0_i32 = arith.constant 0 : i32
    %c0_i32_0 = arith.constant 0 : i32
    %c0_i32_1 = arith.constant 0 : i32
    return %c0_i32, %c0_i32_0 : i32, i32
  }
  func.func @transform_2(%arg0: i32) -> (i32, i32) {
    %c0_i32 = arith.constant 0 : i32
    %c0_i32_0 = arith.constant 0 : i32
    %c0_i32_1 = arith.constant 0 : i32
    return %c0_i32, %c0_i32_0 : i32, i32
  }
  func.func @transform_3(%arg0: i32) -> (i32, i32) {
    %c0_i32 = arith.constant 0 : i32
    %c0_i32_0 = arith.constant 0 : i32
    %c0_i32_1 = arith.constant 0 : i32
    return %c0_i32, %c0_i32_0 : i32, i32
  }
  func.func @transform_4(%arg0: i32) -> (i32, i32) {
    %c0_i32 = arith.constant 0 : i32
    %c0_i32_0 = arith.constant 0 : i32
    %c0_i32_1 = arith.constant 0 : i32
    return %c0_i32, %c0_i32_0 : i32, i32
  }
  func.func @transform_5(%arg0: i32) -> (i32, i32) {
    %c0_i32 = arith.constant 0 : i32
    %c0_i32_0 = arith.constant 0 : i32
    return %arg0, %c0_i32 : i32, i32
  }
}

</mosaic_0001>

<llo_original>
// kernel: tpu_custom_call.1
$region0: #{tpu_custom_call.1}
  #allocation0 [shape = 'u32[]', space=smem, size = 0x4, offset = 0x4, fixed_abs, tag = 'smem constant byte address 0x4 - core index']
  #allocation1 [shape = 'u32[144,128]{1,0:T(1,128)}', space=vmem, size = 0x12000, scoped, tag = 'internal scratch']
  %s0 = inlined_call_operand.hbm [shape: f32[16,2,8,64], index: 0, kind: input, shape index: {}]
  %s1 = inlined_call_operand.hbm [shape: f32[64,64], index: 1, kind: input, shape index: {}]
  %s2 = inlined_call_operand.hbm [shape: f32[64,64], index: 2, kind: input, shape index: {}]
  %s3 = inlined_call_operand.vmem [shape: f32[1,64], index: 3, kind: input, shape index: {}]
  %s4 = inlined_call_operand.vmem [shape: f32[1,64], index: 4, kind: input, shape index: {}]
  %s5 = inlined_call_operand.vmem [shape: f32[128,64], index: 5, kind: output, shape index: {}]
  %s6 = sld [smem:[#allocation0]]
  $region65: #{tpu_custom_call.1} parent=0
    _
  %s8 = ssub.s32 1, %s6
  %s9 = scalar_select 0, %s8, %s6
  $region1: #{tpu_custom_call.1} parent=0
    #allocation2 [shape = 'u8[131072]{0}', space=vmem, size = 0x20000, scoped, tag = 'input window, operand 0']
    #allocation3 [shape = 's32[2]{0}', space=sflag, size = 0x8, scoped, tag = 'scoped memory for tpu_custom_call.1']
    #allocation4 [shape = 'u8[32768]{0}', space=vmem, size = 0x8000, scoped, tag = 'input window, operand 1, single buffered']
    #allocation5 [shape = 's32[1]{0}', space=sflag, size = 0x4, scoped, tag = 'scoped memory for tpu_custom_call.1']
    #allocation6 [shape = 'u8[32768]{0}', space=vmem, size = 0x8000, scoped, tag = 'input window, operand 2, single buffered']
    %10 = vsyncpa [#allocation3], 0
    %s11 = scalar_lea.sflag [#allocation3], 1
    %12 = vsyncpa %s11, 0
    %13 = vsyncpa [#allocation5], 0
    loop: start=0, step=1, limit=4
    $region2: #{tpu_custom_call.1} parent=1 // loop_pre_header
      _
    $region3: #{tpu_custom_call.1} parent=1 // loop_header
      %s15 = sphi 0, %s19
      %p16 = scmp.ge.s32.totalorder %s15, 4
      %s25 = sphi 0, %s27
      %s28 = sphi 0, %s25
      %s29 = sphi 0, %s28
      %s45 = sphi 0, %s29
      %s49 = sphi 0, %s49
      %s51 = sphi 0, %s49
      %s52 = sphi 0, %s51
      %s66 = sphi 0, %s52
      %s70 = sphi 0, %s70
      %s72 = sphi 0, %s70
      %s73 = sphi 0, %s72
      %s87 = sphi 0, %s73
      %s91 = sphi 0, %s91
      %s93 = sphi 0, %s91
      %s94 = sphi 0, %s93
      %s108 = sphi 0, %s94
      %s112 = sphi 0, %s112
      %s114 = sphi 0, %s112
      %s115 = sphi 0, %s114
      %s129 = sphi 0, %s115
      %s135 = sphi 0, %s137
      %s138 = sphi 0, %s135
      %s139 = sphi 0, %s138
      %s155 = sphi 0, %s139
    $region4: #{tpu_custom_call.1} parent=1 // loop_header_branch
      %18 = sbr.rel (%p16) target = $region8
    $region5: #{tpu_custom_call.1} parent=1 // loop_body
      %s20 = ssub.s32 %s15, 1
      %s21 = ssub.s32 %s15, 2
      %s22 = sadd.s32 %s15, 1
      %s23 = ssub.s32 %s15, %s22
      %p24 = scmp.eq.s32.totalorder %s23, 0
      %s26 = sadd.s32 %s25, 1
      %s27 = scalar_select %p24, %s25, %s26
      %p30 = pneg %p24
      %p31 = scmp.eq.s32.totalorder %s15, 1
      %p32 = por %p30, %p31
      %p33 = scmp.ne.s32.totalorder %s25, %s28
      %p34 = scmp.eq.s32.totalorder %s15, 0
      %p35 = por %p33, %p34
      %p36 = scmp.ne.s32.totalorder %s25, %s28
      %p37 = scmp.eq.s32.totalorder %s20, 1
      %p38 = por %p36, %p37
      %p39 = scmp.ne.s32.totalorder %s28, %s29
      %p40 = scmp.eq.s32.totalorder %s20, 0
      %p41 = por %p39, %p40
      %p42 = scmp.ne.s32.totalorder %s28, %s29
      %p43 = scmp.eq.s32.totalorder %s21, 1
      %p44 = por %p42, %p43
      %p46 = scmp.ne.s32.totalorder %s29, %s45
      %p47 = scmp.eq.s32.totalorder %s21, 0
      %p48 = por %p46, %p47
      %s50 = sadd.s32 %s49, 1
      %p53 = scmp.eq.s32.totalorder %s15, 1
      %p54 = scmp.ne.s32.totalorder %s49, %s51
      %p55 = scmp.eq.s32.totalorder %s15, 0
      %p56 = por %p54, %p55
      %p57 = scmp.ne.s32.totalorder %s49, %s51
      %p58 = scmp.eq.s32.totalorder %s20, 1
      %p59 = por %p57, %p58
      %p60 = scmp.ne.s32.totalorder %s51, %s52
      %p61 = scmp.eq.s32.totalorder %s20, 0
      %p62 = por %p60, %p61
      %p63 = scmp.ne.s32.totalorder %s51, %s52
      %p64 = scmp.eq.s32.totalorder %s21, 1
      %p65 = por %p63, %p64
      %p67 = scmp.ne.s32.totalorder %s52, %s66
      %p68 = scmp.eq.s32.totalorder %s21, 0
      %p69 = por %p67, %p68
      %s71 = sadd.s32 %s70, 1
      %p74 = scmp.eq.s32.totalorder %s15, 1
      %p75 = scmp.ne.s32.totalorder %s70, %s72
      %p76 = scmp.eq.s32.totalorder %s15, 0
      %p77 = por %p75, %p76
      %p78 = scmp.ne.s32.totalorder %s70, %s72
      %p79 = scmp.eq.s32.totalorder %s20, 1
      %p80 = por %p78, %p79
      %p81 = scmp.ne.s32.totalorder %s72, %s73
      %p82 = scmp.eq.s32.totalorder %s20, 0
      %p83 = por %p81, %p82
      %p84 = scmp.ne.s32.totalorder %s72, %s73
      %p85 = scmp.eq.s32.totalorder %s21, 1
      %p86 = por %p84, %p85
      %p88 = scmp.ne.s32.totalorder %s73, %s87
      %p89 = scmp.eq.s32.totalorder %s21, 0
      %p90 = por %p88, %p89
      %s92 = sadd.s32 %s91, 1
      %p95 = scmp.eq.s32.totalorder %s15, 1
      %p96 = scmp.ne.s32.totalorder %s91, %s93
      %p97 = scmp.eq.s32.totalorder %s15, 0
      %p98 = por %p96, %p97
      %p99 = scmp.ne.s32.totalorder %s91, %s93
      %p100 = scmp.eq.s32.totalorder %s20, 1
      %p101 = por %p99, %p100
      %p102 = scmp.ne.s32.totalorder %s93, %s94
      %p103 = scmp.eq.s32.totalorder %s20, 0
      %p104 = por %p102, %p103
      %p105 = scmp.ne.s32.totalorder %s93, %s94
      %p106 = scmp.eq.s32.totalorder %s21, 1
      %p107 = por %p105, %p106
      %p109 = scmp.ne.s32.totalorder %s94, %s108
      %p110 = scmp.eq.s32.totalorder %s21, 0
      %p111 = por %p109, %p110
      %s113 = sadd.s32 %s112, 1
      %p116 = scmp.eq.s32.totalorder %s15, 1
      %p117 = scmp.ne.s32.totalorder %s112, %s114
      %p118 = scmp.eq.s32.totalorder %s15, 0
      %p119 = por %p117, %p118
      %p120 = scmp.ne.s32.totalorder %s112, %s114
      %p121 = scmp.eq.s32.totalorder %s20, 1
      %p122 = por %p120, %p121
      %p123 = scmp.ne.s32.totalorder %s114, %s115
      %p124 = scmp.eq.s32.totalorder %s20, 0
      %p125 = por %p123, %p124
      %p126 = scmp.ne.s32.totalorder %s114, %s115
      %p127 = scmp.eq.s32.totalorder %s21, 1
      %p128 = por %p126, %p127
      %p130 = scmp.ne.s32.totalorder %s115, %s129
      %p131 = scmp.eq.s32.totalorder %s21, 0
      %p132 = por %p130, %p131
      %s133 = ssub.s32 %s15, %s22
      %p134 = scmp.eq.s32.totalorder %s133, 0
      %s136 = sadd.s32 %s135, 1
      %s137 = scalar_select %p134, %s135, %s136
      %p140 = pneg %p134
      %p141 = scmp.eq.s32.totalorder %s15, 1
      %p142 = por %p140, %p141
      %p143 = scmp.ne.s32.totalorder %s135, %s138
      %p144 = scmp.eq.s32.totalorder %s15, 0
      %p145 = por %p143, %p144
      %p146 = scmp.ne.s32.totalorder %s135, %s138
      %p147 = scmp.eq.s32.totalorder %s20, 1
      %p148 = por %p146, %p147
      %p149 = scmp.ne.s32.totalorder %s138, %s139
      %p150 = scmp.eq.s32.totalorder %s20, 0
      %p151 = por %p149, %p150
      %p152 = scmp.ne.s32.totalorder %s138, %s139
      %p153 = scmp.eq.s32.totalorder %s21, 1
      %p154 = por %p152, %p153
      %p156 = scmp.ne.s32.totalorder %s139, %s155
      %p157 = scmp.eq.s32.totalorder %s21, 0
      %p158 = por %p156, %p157
      %p159 = scmp.le.s32.totalorder 1, %s15
      %p160 = scmp.lt.s32.totalorder %s15, 3
      %p161 = pnand %p159, %p160
      %p162 = pneg %p161
      // Predicated region
      $region9: #{tpu_custom_call.1} parent=5 // pred_check
        _
      $region10: #{tpu_custom_call.1} parent=5 // pred_check_branch
        %164 = sbr.rel (%p161) target = $region12
      $region11: #{tpu_custom_call.1} parent=5 // pred_region
        %s165 = ssub.s32 %s15, 1
        // Predicated region
        $region13: #{tpu_custom_call.1} parent=11 // pred_check
          %p166 = pneg %p62
        $region14: #{tpu_custom_call.1} parent=11 // pred_check_branch
          %168 = sbr.rel (%p166) target = $region16
        $region15: #{tpu_custom_call.1} parent=11 // pred_region
          %s170 = ssub.s32 1024, 1024
          %171 = vsyncadd [#allocation5], %s170
          %s172 = sshll.u32 [#allocation4], 4
          %s173 = int_to_ptr.vmem [resolvable:$true] %s172
          %178 = dma.hbm_to_vmem [thread:$0]  %s1, 1024, %s173, [#allocation5], 128, 128, 8
        $region16: #{tpu_custom_call.1} parent=11 // pred_fallthru
          _
        // Predicated region
        $region17: #{tpu_custom_call.1} parent=11 // pred_check
          %p179 = pneg %p83
        $region18: #{tpu_custom_call.1} parent=11 // pred_check_branch
          %181 = sbr.rel (%p179) target = $region20
        $region19: #{tpu_custom_call.1} parent=11 // pred_region
          %s183 = ssub.s32 1024, 1024
          %184 = vsyncadd [#allocation5], %s183
          %s185 = sshll.u32 [#allocation6], 4
          %s186 = int_to_ptr.vmem [resolvable:$true] %s185
          %191 = dma.hbm_to_vmem [thread:$0]  %s2, 1024, %s186, [#allocation5], 128, 128, 8
        $region20: #{tpu_custom_call.1} parent=11 // pred_fallthru
          _
        // Predicated region
        $region21: #{tpu_custom_call.1} parent=11 // pred_check
          %p192 = pneg %p104
        $region22: #{tpu_custom_call.1} parent=11 // pred_check_branch
          %194 = sbr.rel (%p192) target = $region24
        $region23: #{tpu_custom_call.1} parent=11 // pred_region
          _
        $region24: #{tpu_custom_call.1} parent=11 // pred_fallthru
          _
        // Predicated region
        $region25: #{tpu_custom_call.1} parent=11 // pred_check
          %p195 = pneg %p125
        $region26: #{tpu_custom_call.1} parent=11 // pred_check_branch
          %197 = sbr.rel (%p195) target = $region28
        $region27: #{tpu_custom_call.1} parent=11 // pred_region
          _
        $region28: #{tpu_custom_call.1} parent=11 // pred_fallthru
          _
      $region12: #{tpu_custom_call.1} parent=5 // pred_fallthru
        _
      %p198 = scmp.lt.s32.totalorder %s15, 2
      // Predicated region
      $region29: #{tpu_custom_call.1} parent=5 // pred_check
        %p199 = pneg %p198
      $region30: #{tpu_custom_call.1} parent=5 // pred_check_branch
        %201 = sbr.rel (%p199) target = $region32
      $region31: #{tpu_custom_call.1} parent=5 // pred_region
        // Predicated region
        $region33: #{tpu_custom_call.1} parent=31 // pred_check
          %p202 = pneg %p35
        $region34: #{tpu_custom_call.1} parent=31 // pred_check_branch
          %204 = sbr.rel (%p202) target = $region36
        $region35: #{tpu_custom_call.1} parent=31 // pred_region
          %s205 = sand.u32 %s25, 1
          %s206 = scalar_lea.sflag [#allocation3], %s205
          %s207 = sand.u32 %s25, 1
          %s208 = smul.addr %s207, 128
          %s209 = scalar_lea.vmem [#allocation2], %s208
          %s210 = smul.u32 8, %s15
          %s212 = ssub.s32 2048, 2048
          %213 = vsyncadd %s206, %s212
          %s214 = smul.addr %s210, 2
          %s215 = smul.addr %s214, 128
          %s216 = scalar_lea.hbm %s0, %s215
          %s217 = sshll.u32 %s209, 4
          %s218 = int_to_ptr.vmem [resolvable:$true] %s217
          %223 = dma.hbm_to_vmem [thread:$0]  %s216, 2048, %s218, %s206, 128, 128, 8
        $region36: #{tpu_custom_call.1} parent=31 // pred_fallthru
          _
      $region32: #{tpu_custom_call.1} parent=5 // pred_fallthru
        _
      %p224 = scmp.le.s32.totalorder 1, %s15
      %p225 = scmp.lt.s32.totalorder %s15, 3
      %p226 = pnand %p224, %p225
      %p227 = pneg %p226
      // Predicated region
      $region37: #{tpu_custom_call.1} parent=5 // pred_check
        _
      $region38: #{tpu_custom_call.1} parent=5 // pred_check_branch
        %229 = sbr.rel (%p226) target = $region40
      $region39: #{tpu_custom_call.1} parent=5 // pred_region
        %s230 = ssub.s32 %s15, 1
        %s231 = sand.u32 %s28, 1
        %s232 = scalar_lea.sflag [#allocation3], %s231
        %s233 = sand.u32 %s28, 1
        %s234 = smul.addr %s233, 128
        %s235 = scalar_lea.vmem [#allocation2], %s234
        // Predicated region
        $region41: #{tpu_custom_call.1} parent=39 // pred_check
          %p236 = pneg %p41
        $region42: #{tpu_custom_call.1} parent=39 // pred_check_branch
          %238 = sbr.rel (%p236) target = $region44
        $region43: #{tpu_custom_call.1} parent=39 // pred_region
          %239 = dma.done %s232, 2048
        $region44: #{tpu_custom_call.1} parent=39 // pred_fallthru
          _
        // Predicated region
        $region45: #{tpu_custom_call.1} parent=39 // pred_check
          %p240 = pneg %p62
        $region46: #{tpu_custom_call.1} parent=39 // pred_check_branch
          %242 = sbr.rel (%p240) target = $region48
        $region47: #{tpu_custom_call.1} parent=39 // pred_region
          %243 = dma.done [#allocation5], 1024
        $region48: #{tpu_custom_call.1} parent=39 // pred_fallthru
          _
        // Predicated region
        $region49: #{tpu_custom_call.1} parent=39 // pred_check
          %p244 = pneg %p83
        $region50: #{tpu_custom_call.1} parent=39 // pred_check_branch
          %246 = sbr.rel (%p244) target = $region52
        $region51: #{tpu_custom_call.1} parent=39 // pred_region
          %247 = dma.done [#allocation5], 1024
        $region52: #{tpu_custom_call.1} parent=39 // pred_fallthru
          _
        %s248 = sand.u32 %s28, 1
        %s249 = scalar_lea.sflag [#allocation3], %s248
        %s250 = sand.u32 %s28, 1
        %s251 = smul.addr %s250, 128
        %s252 = scalar_lea.vmem [#allocation2], %s251
        %p253 = pneg %p41
        %p254 = pneg %p38
        %p255 = pneg %p62
        %p256 = pneg %p59
        %p257 = pneg %p83
        %p258 = pneg %p80
        %p259 = pneg %p104
        %p260 = pneg %p101
        %p261 = pneg %p125
        %p262 = pneg %p122
        %p263 = pneg %p151
        %p264 = pneg %p148
        %s265 = smul.u32 8, %s20
        %p266 = scmp.lt.s32.totalorder %s265, 15
        %s267 = scalar_select %p266, %s265, 15
        %s268 = smul.addr %s267, 8
        %s269 = scalar_lea.vmem %s5, %s268
        %s270 = smul.u32 8, %s20
        %s271 = smul.u32 8, %s20
        %p272 = scmp.lt.s32.totalorder %s271, 15
        %s273 = scalar_select %p272, %s271, 15
        %s274 = smul.addr %s273, 8
        %s275 = scalar_lea.vmem %s5, %s274
        %s276 = smul.u32 8, %s20
        %v277 = vld [vmem:[%s235] sm:$0xff]
        %v278 = vld [vmem:[%s235 + $0x10] sm:$0xff]
        %v279 = vld [vmem:[%s235 + $0x20] sm:$0xff]
        %v280 = vld [vmem:[%s235 + $0x30] sm:$0xff]
        %v281 = vld [vmem:[%s235 + $0x40] sm:$0xff]
        %v282 = vld [vmem:[%s235 + $0x50] sm:$0xff]
        %v283 = vld [vmem:[%s235 + $0x60] sm:$0xff]
        %v284 = vld [vmem:[%s235 + $0x70] sm:$0xff]
        %s285 = scalar_lea.vmem %s235, 8 [#allocation2]
        %v286 = vld [vmem:[%s285] sm:$0xff]
        %v287 = vld [vmem:[%s285 + $0x10] sm:$0xff]
        %v288 = vld [vmem:[%s285 + $0x20] sm:$0xff]
        %v289 = vld [vmem:[%s285 + $0x30] sm:$0xff]
        %v290 = vld [vmem:[%s285 + $0x40] sm:$0xff]
        %v291 = vld [vmem:[%s285 + $0x50] sm:$0xff]
        %v292 = vld [vmem:[%s285 + $0x60] sm:$0xff]
        %v293 = vld [vmem:[%s285 + $0x70] sm:$0xff]
        %vm294 = vcmask 523264
        %v295 = vsel %vm294, %v277, 0.0
        %296 = vadd.xlane.f32.xlu0 %v295
        %v297 = vpop.xlane.xlu0 %296
        %v298 = vsel %vm294, %v278, 0.0
        %299 = vadd.xlane.f32.xlu0 %v298
        %v300 = vpop.xlane.xlu0 %299
        %v301 = vsel %vm294, %v279, 0.0
        %302 = vadd.xlane.f32.xlu0 %v301
        %v303 = vpop.xlane.xlu0 %302
        %v304 = vsel %vm294, %v280, 0.0
        %305 = vadd.xlane.f32.xlu0 %v304
        %v306 = vpop.xlane.xlu0 %305
        %v307 = vsel %vm294, %v281, 0.0
        %308 = vadd.xlane.f32.xlu0 %v307
        %v309 = vpop.xlane.xlu0 %308
        %v310 = vsel %vm294, %v282, 0.0
        %311 = vadd.xlane.f32.xlu0 %v310
        %v312 = vpop.xlane.xlu0 %311
        %v313 = vsel %vm294, %v283, 0.0
        %314 = vadd.xlane.f32.xlu0 %v313
        %v315 = vpop.xlane.xlu0 %314
        %v316 = vsel %vm294, %v284, 0.0
        %317 = vadd.xlane.f32.xlu0 %v316
        %v318 = vpop.xlane.xlu0 %317
        %v319 = vsel %vm294, %v286, 0.0
        %320 = vadd.xlane.f32.xlu0 %v319
        %v321 = vpop.xlane.xlu0 %320
        %v322 = vsel %vm294, %v287, 0.0
        %323 = vadd.xlane.f32.xlu0 %v322
        %v324 = vpop.xlane.xlu0 %323
        %v325 = vsel %vm294, %v288, 0.0
        %326 = vadd.xlane.f32.xlu0 %v325
        %v327 = vpop.xlane.xlu0 %326
        %v328 = vsel %vm294, %v289, 0.0
        %329 = vadd.xlane.f32.xlu0 %v328
        %v330 = vpop.xlane.xlu0 %329
        %v331 = vsel %vm294, %v290, 0.0
        %332 = vadd.xlane.f32.xlu0 %v331
        %v333 = vpop.xlane.xlu0 %332
        %v334 = vsel %vm294, %v291, 0.0
        %335 = vadd.xlane.f32.xlu0 %v334
        %v336 = vpop.xlane.xlu0 %335
        %v337 = vsel %vm294, %v292, 0.0
        %338 = vadd.xlane.f32.xlu0 %v337
        %v339 = vpop.xlane.xlu0 %338
        %v340 = vsel %vm294, %v293, 0.0
        %341 = vadd.xlane.f32.xlu0 %v340
        %v342 = vpop.xlane.xlu0 %341
        %v343 = vadd.f32 %v297, %v321
        %v344 = vadd.f32 %v300, %v324
        %v345 = vadd.f32 %v303, %v327
        %v346 = vadd.f32 %v306, %v330
        %v347 = vadd.f32 %v309, %v333
        %v348 = vadd.f32 %v312, %v336
        %v349 = vadd.f32 %v315, %v339
        %v350 = vadd.f32 %v318, %v342
        %v351 = vmul.f32 %v343, 0.0078125
        %v352 = vmul.f32 %v344, 0.0078125
        %v353 = vmul.f32 %v345, 0.0078125
        %v354 = vmul.f32 %v346, 0.0078125
        %v355 = vmul.f32 %v347, 0.0078125
        %v356 = vmul.f32 %v348, 0.0078125
        %v357 = vmul.f32 %v349, 0.0078125
        %v358 = vmul.f32 %v350, 0.0078125
        %v359 = vsub.f32 %v277, %v351
        %v360 = vsub.f32 %v278, %v352
        %v361 = vsub.f32 %v279, %v353
        %v362 = vsub.f32 %v280, %v354
        %v363 = vsub.f32 %v281, %v355
        %v364 = vsub.f32 %v282, %v356
        %v365 = vsub.f32 %v283, %v357
        %v366 = vsub.f32 %v284, %v358
        %v367 = vsub.f32 %v286, %v351
        %v368 = vsub.f32 %v287, %v352
        %v369 = vsub.f32 %v288, %v353
        %v370 = vsub.f32 %v289, %v354
        %v371 = vsub.f32 %v290, %v355
        %v372 = vsub.f32 %v291, %v356
        %v373 = vsub.f32 %v292, %v357
        %v374 = vsub.f32 %v293, %v358
        %v375 = vmul.f32 %v359, %v359
        %v376 = vmul.f32 %v360, %v360
        %v377 = vmul.f32 %v361, %v361
        %v378 = vmul.f32 %v362, %v362
        %v379 = vmul.f32 %v363, %v363
        %v380 = vmul.f32 %v364, %v364
        %v381 = vmul.f32 %v365, %v365
        %v382 = vmul.f32 %v366, %v366
        %v383 = vsel %vm294, %v375, 0.0
        %384 = vadd.xlane.f32.xlu0 %v383
        %v385 = vpop.xlane.xlu0 %384
        %v386 = vsel %vm294, %v376, 0.0
        %387 = vadd.xlane.f32.xlu0 %v386
        %v388 = vpop.xlane.xlu0 %387
        %v389 = vsel %vm294, %v377, 0.0
        %390 = vadd.xlane.f32.xlu0 %v389
        %v391 = vpop.xlane.xlu0 %390
        %v392 = vsel %vm294, %v378, 0.0
        %393 = vadd.xlane.f32.xlu0 %v392
        %v394 = vpop.xlane.xlu0 %393
        %v395 = vsel %vm294, %v379, 0.0
        %396 = vadd.xlane.f32.xlu0 %v395
        %v397 = vpop.xlane.xlu0 %396
        %v398 = vsel %vm294, %v380, 0.0
        %399 = vadd.xlane.f32.xlu0 %v398
        %v400 = vpop.xlane.xlu0 %399
        %v401 = vsel %vm294, %v381, 0.0
        %402 = vadd.xlane.f32.xlu0 %v401
        %v403 = vpop.xlane.xlu0 %402
        %v404 = vsel %vm294, %v382, 0.0
        %405 = vadd.xlane.f32.xlu0 %v404
        %v406 = vpop.xlane.xlu0 %405
        %v407 = vmul.f32 %v367, %v367
        %v408 = vmul.f32 %v368, %v368
        %v409 = vmul.f32 %v369, %v369
        %v410 = vmul.f32 %v370, %v370
        %v411 = vmul.f32 %v371, %v371
        %v412 = vmul.f32 %v372, %v372
        %v413 = vmul.f32 %v373, %v373
        %v414 = vmul.f32 %v374, %v374
        %v415 = vsel %vm294, %v407, 0.0
        %416 = vadd.xlane.f32.xlu0 %v415
        %v417 = vpop.xlane.xlu0 %416
        %v418 = vsel %vm294, %v408, 0.0
        %419 = vadd.xlane.f32.xlu0 %v418
        %v420 = vpop.xlane.xlu0 %419
        %v421 = vsel %vm294, %v409, 0.0
        %422 = vadd.xlane.f32.xlu0 %v421
        %v423 = vpop.xlane.xlu0 %422
        %v424 = vsel %vm294, %v410, 0.0
        %425 = vadd.xlane.f32.xlu0 %v424
        %v426 = vpop.xlane.xlu0 %425
        %v427 = vsel %vm294, %v411, 0.0
        %428 = vadd.xlane.f32.xlu0 %v427
        %v429 = vpop.xlane.xlu0 %428
        %v430 = vsel %vm294, %v412, 0.0
        %431 = vadd.xlane.f32.xlu0 %v430
        %v432 = vpop.xlane.xlu0 %431
        %v433 = vsel %vm294, %v413, 0.0
        %434 = vadd.xlane.f32.xlu0 %v433
        %v435 = vpop.xlane.xlu0 %434
        %v436 = vsel %vm294, %v414, 0.0
        %437 = vadd.xlane.f32.xlu0 %v436
        %v438 = vpop.xlane.xlu0 %437
        %v439 = vadd.f32 %v385, %v417
        %v440 = vadd.f32 %v388, %v420
        %v441 = vadd.f32 %v391, %v423
        %v442 = vadd.f32 %v394, %v426
        %v443 = vadd.f32 %v397, %v429
        %v444 = vadd.f32 %v400, %v432
        %v445 = vadd.f32 %v403, %v435
        %v446 = vadd.f32 %v406, %v438
        %v447 = vmul.f32 %v439, 0.0078125
        %v448 = vmul.f32 %v440, 0.0078125
        %v449 = vmul.f32 %v441, 0.0078125
        %v450 = vmul.f32 %v442, 0.0078125
        %v451 = vmul.f32 %v443, 0.0078125
        %v452 = vmul.f32 %v444, 0.0078125
        %v453 = vmul.f32 %v445, 0.0078125
        %v454 = vmul.f32 %v446, 0.0078125
        %v455 = vadd.f32 %v447, 1e-05
        %v456 = vadd.f32 %v448, 1e-05
        %v457 = vadd.f32 %v449, 1e-05
        %v458 = vadd.f32 %v450, 1e-05
        %v459 = vadd.f32 %v451, 1e-05
        %v460 = vadd.f32 %v452, 1e-05
        %v461 = vadd.f32 %v453, 1e-05
        %v462 = vadd.f32 %v454, 1e-05
        %v463 = vrsqrt.pop %v455
        %v464 = vrsqrt.pop %v456
        %v465 = vrsqrt.pop %v457
        %v466 = vrsqrt.pop %v458
        %v467 = vrsqrt.pop %v459
        %v468 = vrsqrt.pop %v460
        %v469 = vrsqrt.pop %v461
        %v470 = vrsqrt.pop %v462
        %v471 = vld [vmem:[#allocation4] sm:$0xff]
        %v472 = vld [vmem:[#allocation4 + $0x8] sm:$0xff]
        %v473 = vld [vmem:[#allocation4 + $0x10] sm:$0xff]
        %v474 = vld [vmem:[#allocation4 + $0x18] sm:$0xff]
        %v475 = vld [vmem:[#allocation4 + $0x20] sm:$0xff]
        %v476 = vld [vmem:[#allocation4 + $0x28] sm:$0xff]
        %v477 = vld [vmem:[#allocation4 + $0x30] sm:$0xff]
        %v478 = vld [vmem:[#allocation4 + $0x38] sm:$0xff]
        %v479 = vld [vmem:[#allocation6] sm:$0xff]
        %v480 = vld [vmem:[#allocation6 + $0x8] sm:$0xff]
        %v481 = vld [vmem:[#allocation6 + $0x10] sm:$0xff]
        %v482 = vld [vmem:[#allocation6 + $0x18] sm:$0xff]
        %v483 = vld [vmem:[#allocation6 + $0x20] sm:$0xff]
        %v484 = vld [vmem:[#allocation6 + $0x28] sm:$0xff]
        %v485 = vld [vmem:[#allocation6 + $0x30] sm:$0xff]
        %v486 = vld [vmem:[#allocation6 + $0x38] sm:$0xff]
        %v488 = vsel %vm294, %v286, 0
        %v491 = vsel %vm294, %v287, 0
        %v494 = vsel %vm294, %v288, 0
        %v497 = vsel %vm294, %v289, 0
        %v500 = vsel %vm294, %v290, 0
        %v503 = vsel %vm294, %v291, 0
        %v506 = vsel %vm294, %v292, 0
        %v509 = vsel %vm294, %v293, 0
        %511 = vmatprep.subr.mxu0 0.0
        %v512 = vand.u32 %v479, 4294901760
        %513 = vmatpush1.msra.mxu0 %v512
        %514 = vmatprep.subr.mxu0 0.0
        %v515 = vand.u32 %v480, 4294901760
        %516 = vmatpush1.msra.mxu0 %v515
        %517 = vmatprep.subr.mxu0 0.0
        %v518 = vand.u32 %v481, 4294901760
        %519 = vmatpush1.msra.mxu0 %v518
        %520 = vmatprep.subr.mxu0 0.0
        %v521 = vand.u32 %v482, 4294901760
        %522 = vmatpush1.msra.mxu0 %v521
        %523 = vmatprep.subr.mxu0 0.0
        %v524 = vand.u32 %v483, 4294901760
        %525 = vmatpush1.msra.mxu0 %v524
        %526 = vmatprep.subr.mxu0 0.0
        %v527 = vand.u32 %v484, 4294901760
        %528 = vmatpush1.msra.mxu0 %v527
        %529 = vmatprep.subr.mxu0 0.0
        %v530 = vand.u32 %v485, 4294901760
        %531 = vmatpush1.msra.mxu0 %v530
        %532 = vmatprep.subr.mxu0 0.0
        %v533 = vand.u32 %v486, 4294901760
        %534 = vmatpush1.msra.mxu0 %v533
        %535 = vmatprep.subr.mxu0 0.0
        %536 = vmatpush1.msra.mxu0 0.0
        %537 = vmatprep.subr.mxu0 0.0
        %538 = vmatpush1.msra.mxu0 0.0
        %539 = vmatprep.subr.mxu0 0.0
        %540 = vmatpush1.msra.mxu0 0.0
        %541 = vmatprep.subr.mxu0 0.0
        %542 = vmatpush1.msra.mxu0 0.0
        %543 = vmatprep.subr.mxu0 0.0
        %544 = vmatpush1.msra.mxu0 0.0
        %545 = vmatprep.subr.mxu0 0.0
        %546 = vmatpush1.msra.mxu0 0.0
        %547 = vmatprep.subr.mxu0 0.0
        %548 = vmatpush1.msra.mxu0 0.0
        %549 = vmatprep.subr.mxu0 0.0
        %550 = vmatpush1.msra.mxu0 0.0
        %551 = vmatprep.subr.mxu0 0.0
        %552 = vmatpush1.msra.mxu0 0.0
        %553 = vmatprep.subr.mxu0 0.0
        %554 = vmatpush1.msra.mxu0 0.0
        %555 = vmatprep.subr.mxu0 0.0
        %556 = vmatpush1.msra.mxu0 0.0
        %557 = vmatprep.subr.mxu0 0.0
        %558 = vmatpush1.msra.mxu0 0.0
        %559 = vmatprep.subr.mxu0 0.0
        %560 = vmatpush1.msra.mxu0 0.0
        %561 = vmatprep.subr.mxu0 0.0
        %562 = vmatpush1.msra.mxu0 0.0
        %563 = vmatprep.subr.mxu0 0.0
        %564 = vmatpush1.msra.mxu0 0.0
        %565 = vmatprep.subr.mxu0 0.0
        %566 = vmatpush1.msra.mxu0 0.0
        %567 = vmatprep.subr.mxu0 0.0
        %568 = vmatpush1.msra.mxu0 0.0
        %569 = vmatprep.subr.mxu0 0.0
        %570 = vmatpush1.msra.mxu0 0.0
        %571 = vmatprep.subr.mxu0 0.0
        %572 = vmatpush1.msra.mxu0 0.0
        %573 = vmatprep.subr.mxu0 0.0
        %574 = vmatpush1.msra.mxu0 0.0
        %575 = vmatprep.subr.mxu0 0.0
        %576 = vmatpush1.msra.mxu0 0.0
        %577 = vmatprep.subr.mxu0 0.0
        %578 = vmatpush1.msra.mxu0 0.0
        %579 = vmatprep.subr.mxu0 0.0
        %580 = vmatpush1.msra.mxu0 0.0
        %581 = vmatprep.subr.mxu0 0.0
        %582 = vmatpush1.msra.mxu0 0.0
        %583 = vmatprep.mubr.f32.mxu0 0.0
        %v584 = vand.u32 %v488, 4294901760
        %v585 = vsub.f32 %v488, %v584
        %v586 = vand.u32 %v585, 4294901760
        %v587 = vsub.f32 %v585, %v586
        %v588 = vand.u32 %v587, 4294901760
        %589 = vmatmul.mubr.f32.gmra.mrb[0].mxu0 %v588
        %v590 = vpop.f32.mrb[0].mxu0
        %v591 = vadd.f32 0.0, %v590
        %v592 = vpop.f32.mrb[0].mxu0
        %593 = vmatprep.mubr.f32.mxu0 0.0
        %v594 = vand.u32 %v491, 4294901760
        %v595 = vsub.f32 %v491, %v594
        %v596 = vand.u32 %v595, 4294901760
        %v597 = vsub.f32 %v595, %v596
        %v598 = vand.u32 %v597, 4294901760
        %599 = vmatmul.mubr.f32.gmra.mrb[0].mxu0 %v598
        %v600 = vpop.f32.mrb[0].mxu0
        %v601 = vadd.f32 0.0, %v600
        %v602 = vpop.f32.mrb[0].mxu0
        %603 = vmatprep.mubr.f32.mxu0 0.0
        %v604 = vand.u32 %v494, 4294901760
        %v605 = vsub.f32 %v494, %v604
        %v606 = vand.u32 %v605, 4294901760
        %v607 = vsub.f32 %v605, %v606
        %v608 = vand.u32 %v607, 4294901760
        %609 = vmatmul.mubr.f32.gmra.mrb[0].mxu0 %v608
        %v610 = vpop.f32.mrb[0].mxu0
        %v611 = vadd.f32 0.0, %v610
        %v612 = vpop.f32.mrb[0].mxu0
        %613 = vmatprep.mubr.f32.mxu0 0.0
        %v614 = vand.u32 %v497, 4294901760
        %v615 = vsub.f32 %v497, %v614
        %v616 = vand.u32 %v615, 4294901760
        %v617 = vsub.f32 %v615, %v616
        %v618 = vand.u32 %v617, 4294901760
        %619 = vmatmul.mubr.f32.gmra.mrb[0].mxu0 %v618
        %v620 = vpop.f32.mrb[0].mxu0
        %v621 = vadd.f32 0.0, %v620
        %v622 = vpop.f32.mrb[0].mxu0
        %623 = vmatprep.mubr.f32.mxu0 0.0
        %v624 = vand.u32 %v500, 4294901760
        %v625 = vsub.f32 %v500, %v624
        %v626 = vand.u32 %v625, 4294901760
        %v627 = vsub.f32 %v625, %v626
        %v628 = vand.u32 %v627, 4294901760
        %629 = vmatmul.mubr.f32.gmra.mrb[0].mxu0 %v628
        %v630 = vpop.f32.mrb[0].mxu0
        %v631 = vadd.f32 0.0, %v630
        %v632 = vpop.f32.mrb[0].mxu0
        %633 = vmatprep.mubr.f32.mxu0 0.0
        %v634 = vand.u32 %v503, 4294901760
        %v635 = vsub.f32 %v503, %v634
        %v636 = vand.u32 %v635, 4294901760
        %v637 = vsub.f32 %v635, %v636
        %v638 = vand.u32 %v637, 4294901760
        %639 = vmatmul.mubr.f32.gmra.mrb[0].mxu0 %v638
        %v640 = vpop.f32.mrb[0].mxu0
        %v641 = vadd.f32 0.0, %v640
        %v642 = vpop.f32.mrb[0].mxu0
        %643 = vmatprep.mubr.f32.mxu0 0.0
        %v644 = vand.u32 %v506, 4294901760
        %v645 = vsub.f32 %v506, %v644
        %v646 = vand.u32 %v645, 4294901760
        %v647 = vsub.f32 %v645, %v646
        %v648 = vand.u32 %v647, 4294901760
        %649 = vmatmul.mubr.f32.gmra.mrb[0].mxu0 %v648
        %v650 = vpop.f32.mrb[0].mxu0
        %v651 = vadd.f32 0.0, %v650
        %v652 = vpop.f32.mrb[0].mxu0
        %653 = vmatprep.mubr.f32.mxu0 0.0
        %v654 = vand.u32 %v509, 4294901760
        %v655 = vsub.f32 %v509, %v654
        %v656 = vand.u32 %v655, 4294901760
        %v657 = vsub.f32 %v655, %v656
        %v658 = vand.u32 %v657, 4294901760
        %659 = vmatmul.mubr.f32.gmra.mrb[0].mxu0 %v658
        %v660 = vpop.f32.mrb[0].mxu0
        %v661 = vadd.f32 0.0, %v660
        %v662 = vpop.f32.mrb[0].mxu0
        %663 = vdwg.mxu0
        %664 = vmatprep.subr.mxu0 0.0
        %v665 = vand.u32 %v479, 4294901760
        %v666 = vsub.f32 %v479, %v665
        %v667 = vand.u32 %v666, 4294901760
        %v668 = vsub.f32 %v666, %v667
        %v669 = vand.u32 %v668, 4294901760
        %670 = vmatpush1.msra.mxu0 %v669
        %671 = vmatprep.subr.mxu0 0.0
        %v672 = vand.u32 %v480, 4294901760
        %v673 = vsub.f32 %v480, %v672
        %v674 = vand.u32 %v673, 4294901760
        %v675 = vsub.f32 %v673, %v674
        %v676 = vand.u32 %v675, 4294901760
        %677 = vmatpush1.msra.mxu0 %v676
        %678 = vmatprep.subr.mxu0 0.0
        %v679 = vand.u32 %v481, 4294901760
        %v680 = vsub.f32 %v481, %v679
        %v681 = vand.u32 %v680, 4294901760
        %v682 = vsub.f32 %v680, %v681
        %v683 = vand.u32 %v682, 4294901760
        %684 = vmatpush1.msra.mxu0 %v683
        %685 = vmatprep.subr.mxu0 0.0
        %v686 = vand.u32 %v482, 4294901760
        %v687 = vsub.f32 %v482, %v686
        %v688 = vand.u32 %v687, 4294901760
        %v689 = vsub.f32 %v687, %v688
        %v690 = vand.u32 %v689, 4294901760
        %691 = vmatpush1.msra.mxu0 %v690
        %692 = vmatprep.subr.mxu0 0.0
        %v693 = vand.u32 %v483, 4294901760
        %v694 = vsub.f32 %v483, %v693
        %v695 = vand.u32 %v694, 4294901760
        %v696 = vsub.f32 %v694, %v695
        %v697 = vand.u32 %v696, 4294901760
        %698 = vmatpush1.msra.mxu0 %v697
        %699 = vmatprep.subr.mxu0 0.0
        %v700 = vand.u32 %v484, 4294901760
        %v701 = vsub.f32 %v484, %v700
        %v702 = vand.u32 %v701, 4294901760
        %v703 = vsub.f32 %v701, %v702
        %v704 = vand.u32 %v703, 4294901760
        %705 = vmatpush1.msra.mxu0 %v704
        %706 = vmatprep.subr.mxu0 0.0
        %v707 = vand.u32 %v485, 4294901760
        %v708 = vsub.f32 %v485, %v707
        %v709 = vand.u32 %v708, 4294901760
        %v710 = vsub.f32 %v708, %v709
        %v711 = vand.u32 %v710, 4294901760
        %712 = vmatpush1.msra.mxu0 %v711
        %713 = vmatprep.subr.mxu0 0.0
        %v714 = vand.u32 %v486, 4294901760
        %v715 = vsub.f32 %v486, %v714
        %v716 = vand.u32 %v715, 4294901760
        %v717 = vsub.f32 %v715, %v716
        %v718 = vand.u32 %v717, 4294901760
        %719 = vmatpush1.msra.mxu0 %v718
        %720 = vmatprep.subr.mxu0 0.0
        %721 = vmatpush1.msra.mxu0 0.0
        %722 = vmatprep.subr.mxu0 0.0
        %723 = vmatpush1.msra.mxu0 0.0
        %724 = vmatprep.subr.mxu0 0.0
        %725 = vmatpush1.msra.mxu0 0.0
        %726 = vmatprep.subr.mxu0 0.0
        %727 = vmatpush1.msra.mxu0 0.0
        %728 = vmatprep.subr.mxu0 0.0
        %729 = vmatpush1.msra.mxu0 0.0
        %730 = vmatprep.subr.mxu0 0.0
        %731 = vmatpush1.msra.mxu0 0.0
        %732 = vmatprep.subr.mxu0 0.0
        %733 = vmatpush1.msra.mxu0 0.0
        %734 = vmatprep.subr.mxu0 0.0
        %735 = vmatpush1.msra.mxu0 0.0
        %736 = vmatprep.subr.mxu0 0.0
        %737 = vmatpush1.msra.mxu0 0.0
        %738 = vmatprep.subr.mxu0 0.0
        %739 = vmatpush1.msra.mxu0 0.0
        %740 = vmatprep.subr.mxu0 0.0
        %741 = vmatpush1.msra.mxu0 0.0
        %742 = vmatprep.subr.mxu0 0.0
        %743 = vmatpush1.msra.mxu0 0.0
        %744 = vmatprep.subr.mxu0 0.0
        %745 = vmatpush1.msra.mxu0 0.0
        %746 = vmatprep.subr.mxu0 0.0
        %747 = vmatpush1.msra.mxu0 0.0
        %748 = vmatprep.subr.mxu0 0.0
        %749 = vmatpush1.msra.mxu0 0.0
        %750 = vmatprep.subr.mxu0 0.0
        %751 = vmatpush1.msra.mxu0 0.0
        %752 = vmatprep.subr.mxu0 0.0
        %753 = vmatpush1.msra.mxu0 0.0
        %754 = vmatprep.subr.mxu0 0.0
        %755 = vmatpush1.msra.mxu0 0.0
        %756 = vmatprep.subr.mxu0 0.0
        %757 = vmatpush1.msra.mxu0 0.0
        %758 = vmatprep.subr.mxu0 0.0
        %759 = vmatpush1.msra.mxu0 0.0
        %760 = vmatprep.subr.mxu0 0.0
        %761 = vmatpush1.msra.mxu0 0.0
        %762 = vmatprep.subr.mxu0 0.0
        %763 = vmatpush1.msra.mxu0 0.0
        %764 = vmatprep.subr.mxu0 0.0
        %765 = vmatpush1.msra.mxu0 0.0
        %766 = vmatprep.subr.mxu0 0.0
        %767 = vmatpush1.msra.mxu0 0.0
        %768 = vmatprep.mubr.f32.mxu0 0.0
        %v769 = vand.u32 %v488, 4294901760
        %770 = vmatmul.mubr.f32.gmra.mrb[0].mxu0 %v769
        %v771 = vpop.f32.mrb[0].mxu0
        %v772 = vadd.f32 %v591, %v771
        %v773 = vpop.f32.mrb[0].mxu0
        %774 = vmatprep.mubr.f32.mxu0 0.0
        %v775 = vand.u32 %v491, 4294901760
        %776 = vmatmul.mubr.f32.gmra.mrb[0].mxu0 %v775
        %v777 = vpop.f32.mrb[0].mxu0
        %v778 = vadd.f32 %v601, %v777
        %v779 = vpop.f32.mrb[0].mxu0
        %780 = vmatprep.mubr.f32.mxu0 0.0
        %v781 = vand.u32 %v494, 4294901760
        %782 = vmatmul.mubr.f32.gmra.mrb[0].mxu0 %v781
        %v783 = vpop.f32.mrb[0].mxu0
        %v784 = vadd.f32 %v611, %v783
        %v785 = vpop.f32.mrb[0].mxu0
        %786 = vmatprep.mubr.f32.mxu0 0.0
        %v787 = vand.u32 %v497, 4294901760
        %788 = vmatmul.mubr.f32.gmra.mrb[0].mxu0 %v787
        %v789 = vpop.f32.mrb[0].mxu0
        %v790 = vadd.f32 %v621, %v789
        %v791 = vpop.f32.mrb[0].mxu0
        %792 = vmatprep.mubr.f32.mxu0 0.0
        %v793 = vand.u32 %v500, 4294901760
        %794 = vmatmul.mubr.f32.gmra.mrb[0].mxu0 %v793
        %v795 = vpop.f32.mrb[0].mxu0
        %v796 = vadd.f32 %v631, %v795
        %v797 = vpop.f32.mrb[0].mxu0
        %798 = vmatprep.mubr.f32.mxu0 0.0
        %v799 = vand.u32 %v503, 4294901760
        %800 = vmatmul.mubr.f32.gmra.mrb[0].mxu0 %v799
        %v801 = vpop.f32.mrb[0].mxu0
        %v802 = vadd.f32 %v641, %v801
        %v803 = vpop.f32.mrb[0].mxu0
        %804 = vmatprep.mubr.f32.mxu0 0.0
        %v805 = vand.u32 %v506, 4294901760
        %806 = vmatmul.mubr.f32.gmra.mrb[0].mxu0 %v805
        %v807 = vpop.f32.mrb[0].mxu0
        %v808 = vadd.f32 %v651, %v807
        %v809 = vpop.f32.mrb[0].mxu0
        %810 = vmatprep.mubr.f32.mxu0 0.0
        %v811 = vand.u32 %v509, 4294901760
        %812 = vmatmul.mubr.f32.gmra.mrb[0].mxu0 %v811
        %v813 = vpop.f32.mrb[0].mxu0
        %v814 = vadd.f32 %v661, %v813
        %v815 = vpop.f32.mrb[0].mxu0
        %816 = vdwg.mxu0
        %817 = vmatprep.subr.mxu0 0.0
        %v818 = vand.u32 %v479, 4294901760
        %v819 = vsub.f32 %v479, %v818
        %820 = vmatpush1.msra.mxu0 %v819
        %821 = vmatprep.subr.mxu0 0.0
        %v822 = vand.u32 %v480, 4294901760
        %v823 = vsub.f32 %v480, %v822
        %824 = vmatpush1.msra.mxu0 %v823
        %825 = vmatprep.subr.mxu0 0.0
        %v826 = vand.u32 %v481, 4294901760
        %v827 = vsub.f32 %v481, %v826
        %828 = vmatpush1.msra.mxu0 %v827
        %829 = vmatprep.subr.mxu0 0.0
        %v830 = vand.u32 %v482, 4294901760
        %v831 = vsub.f32 %v482, %v830
        %832 = vmatpush1.msra.mxu0 %v831
        %833 = vmatprep.subr.mxu0 0.0
        %v834 = vand.u32 %v483, 4294901760
        %v835 = vsub.f32 %v483, %v834
        %836 = vmatpush1.msra.mxu0 %v835
        %837 = vmatprep.subr.mxu0 0.0
        %v838 = vand.u32 %v484, 4294901760
        %v839 = vsub.f32 %v484, %v838
        %840 = vmatpush1.msra.mxu0 %v839
        %841 = vmatprep.subr.mxu0 0.0
        %v842 = vand.u32 %v485, 4294901760
        %v843 = vsub.f32 %v485, %v842
        %844 = vmatpush1.msra.mxu0 %v843
        %845 = vmatprep.subr.mxu0 0.0
        %v846 = vand.u32 %v486, 4294901760
        %v847 = vsub.f32 %v486, %v846
        %848 = vmatpush1.msra.mxu0 %v847
        %849 = vmatprep.subr.mxu0 0.0
        %850 = vmatpush1.msra.mxu0 0.0
        %851 = vmatprep.subr.mxu0 0.0
        %852 = vmatpush1.msra.mxu0 0.0
        %853 = vmatprep.subr.mxu0 0.0
        %854 = vmatpush1.msra.mxu0 0.0
        %855 = vmatprep.subr.mxu0 0.0
        %856 = vmatpush1.msra.mxu0 0.0
        %857 = vmatprep.subr.mxu0 0.0
        %858 = vmatpush1.msra.mxu0 0.0
        %859 = vmatprep.subr.mxu0 0.0
        %860 = vmatpush1.msra.mxu0 0.0
        %861 = vmatprep.subr.mxu0 0.0
        %862 = vmatpush1.msra.mxu0 0.0
        %863 = vmatprep.subr.mxu0 0.0
        %864 = vmatpush1.msra.mxu0 0.0
        %865 = vmatprep.subr.mxu0 0.0
        %866 = vmatpush1.msra.mxu0 0.0
        %867 = vmatprep.subr.mxu0 0.0
        %868 = vmatpush1.msra.mxu0 0.0
        %869 = vmatprep.subr.mxu0 0.0
        %870 = vmatpush1.msra.mxu0 0.0
        %871 = vmatprep.subr.mxu0 0.0
        %872 = vmatpush1.msra.mxu0 0.0
        %873 = vmatprep.subr.mxu0 0.0
        %874 = vmatpush1.msra.mxu0 0.0
        %875 = vmatprep.subr.mxu0 0.0
        %876 = vmatpush1.msra.mxu0 0.0
        %877 = vmatprep.subr.mxu0 0.0
        %878 = vmatpush1.msra.mxu0 0.0
        %879 = vmatprep.subr.mxu0 0.0
        %880 = vmatpush1.msra.mxu0 0.0
        %881 = vmatprep.subr.mxu0 0.0
        %882 = vmatpush1.msra.mxu0 0.0
        %883 = vmatprep.subr.mxu0 0.0
        %884 = vmatpush1.msra.mxu0 0.0
        %885 = vmatprep.subr.mxu0 0.0
        %886 = vmatpush1.msra.mxu0 0.0
        %887 = vmatprep.subr.mxu0 0.0
        %888 = vmatpush1.msra.mxu0 0.0
        %889 = vmatprep.subr.mxu0 0.0
        %890 = vmatpush1.msra.mxu0 0.0
        %891 = vmatprep.subr.mxu0 0.0
        %892 = vmatpush1.msra.mxu0 0.0
        %893 = vmatprep.subr.mxu0 0.0
        %894 = vmatpush1.msra.mxu0 0.0
        %895 = vmatprep.subr.mxu0 0.0
        %896 = vmatpush1.msra.mxu0 0.0
        %897 = vmatprep.mubr.f32.mxu0 0.0
        %v898 = vand.u32 %v488, 4294901760
        %v899 = vsub.f32 %v488, %v898
        %900 = vmatmul.mubr.f32.gmra.mrb[0].mxu0 %v899
        %v901 = vpop.f32.mrb[0].mxu0
        %v902 = vadd.f32 %v772, %v901
        %v903 = vpop.f32.mrb[0].mxu0
        %904 = vmatprep.mubr.f32.mxu0 0.0
        %v905 = vand.u32 %v491, 4294901760
        %v906 = vsub.f32 %v491, %v905
        %907 = vmatmul.mubr.f32.gmra.mrb[0].mxu0 %v906
        %v908 = vpop.f32.mrb[0].mxu0
        %v909 = vadd.f32 %v778, %v908
        %v910 = vpop.f32.mrb[0].mxu0
        %911 = vmatprep.mubr.f32.mxu0 0.0
        %v912 = vand.u32 %v494, 4294901760
        %v913 = vsub.f32 %v494, %v912
        %914 = vmatmul.mubr.f32.gmra.mrb[0].mxu0 %v913
        %v915 = vpop.f32.mrb[0].mxu0
        %v916 = vadd.f32 %v784, %v915
        %v917 = vpop.f32.mrb[0].mxu0
        %918 = vmatprep.mubr.f32.mxu0 0.0
        %v919 = vand.u32 %v497, 4294901760
        %v920 = vsub.f32 %v497, %v919
        %921 = vmatmul.mubr.f32.gmra.mrb[0].mxu0 %v920
        %v922 = vpop.f32.mrb[0].mxu0
        %v923 = vadd.f32 %v790, %v922
        %v924 = vpop.f32.mrb[0].mxu0
        %925 = vmatprep.mubr.f32.mxu0 0.0
        %v926 = vand.u32 %v500, 4294901760
        %v927 = vsub.f32 %v500, %v926
        %928 = vmatmul.mubr.f32.gmra.mrb[0].mxu0 %v927
        %v929 = vpop.f32.mrb[0].mxu0
        %v930 = vadd.f32 %v796, %v929
        %v931 = vpop.f32.mrb[0].mxu0
        %932 = vmatprep.mubr.f32.mxu0 0.0
        %v933 = vand.u32 %v503, 4294901760
        %v934 = vsub.f32 %v503, %v933
        %935 = vmatmul.mubr.f32.gmra.mrb[0].mxu0 %v934
        %v936 = vpop.f32.mrb[0].mxu0
        %v937 = vadd.f32 %v802, %v936
        %v938 = vpop.f32.mrb[0].mxu0
        %939 = vmatprep.mubr.f32.mxu0 0.0
        %v940 = vand.u32 %v506, 4294901760
        %v941 = vsub.f32 %v506, %v940
        %942 = vmatmul.mubr.f32.gmra.mrb[0].mxu0 %v941
        %v943 = vpop.f32.mrb[0].mxu0
        %v944 = vadd.f32 %v808, %v943
        %v945 = vpop.f32.mrb[0].mxu0
        %946 = vmatprep.mubr.f32.mxu0 0.0
        %v947 = vand.u32 %v509, 4294901760
        %v948 = vsub.f32 %v509, %v947
        %949 = vmatmul.mubr.f32.gmra.mrb[0].mxu0 %v948
        %v950 = vpop.f32.mrb[0].mxu0
        %v951 = vadd.f32 %v814, %v950
        %v952 = vpop.f32.mrb[0].mxu0
        %953 = vdwg.mxu0
        %954 = vmatprep.subr.mxu0 0.0
        %v955 = vand.u32 %v479, 4294901760
        %956 = vmatpush1.msra.mxu0 %v955
        %957 = vmatprep.subr.mxu0 0.0
        %v958 = vand.u32 %v480, 4294901760
        %959 = vmatpush1.msra.mxu0 %v958
        %960 = vmatprep.subr.mxu0 0.0
        %v961 = vand.u32 %v481, 4294901760
        %962 = vmatpush1.msra.mxu0 %v961
        %963 = vmatprep.subr.mxu0 0.0
        %v964 = vand.u32 %v482, 4294901760
        %965 = vmatpush1.msra.mxu0 %v964
        %966 = vmatprep.subr.mxu0 0.0
        %v967 = vand.u32 %v483, 4294901760
        %968 = vmatpush1.msra.mxu0 %v967
        %969 = vmatprep.subr.mxu0 0.0
        %v970 = vand.u32 %v484, 4294901760
        %971 = vmatpush1.msra.mxu0 %v970
        %972 = vmatprep.subr.mxu0 0.0
        %v973 = vand.u32 %v485, 4294901760
        %974 = vmatpush1.msra.mxu0 %v973
        %975 = vmatprep.subr.mxu0 0.0
        %v976 = vand.u32 %v486, 4294901760
        %977 = vmatpush1.msra.mxu0 %v976
        %978 = vmatprep.subr.mxu0 0.0
        %979 = vmatpush1.msra.mxu0 0.0
        %980 = vmatprep.subr.mxu0 0.0
        %981 = vmatpush1.msra.mxu0 0.0
        %982 = vmatprep.subr.mxu0 0.0
        %983 = vmatpush1.msra.mxu0 0.0
        %984 = vmatprep.subr.mxu0 0.0
        %985 = vmatpush1.msra.mxu0 0.0
        %986 = vmatprep.subr.mxu0 0.0
        %987 = vmatpush1.msra.mxu0 0.0
        %988 = vmatprep.subr.mxu0 0.0
        %989 = vmatpush1.msra.mxu0 0.0
        %990 = vmatprep.subr.mxu0 0.0
        %991 = vmatpush1.msra.mxu0 0.0
        %992 = vmatprep.subr.mxu0 0.0
        %993 = vmatpush1.msra.mxu0 0.0
        %994 = vmatprep.subr.mxu0 0.0
        %995 = vmatpush1.msra.mxu0 0.0
        %996 = vmatprep.subr.mxu0 0.0
        %997 = vmatpush1.msra.mxu0 0.0
        %998 = vmatprep.subr.mxu0 0.0
        %999 = vmatpush1.msra.mxu0 0.0
        %1000 = vmatprep.subr.mxu0 0.0
        %1001 = vmatpush1.msra.mxu0 0.0
        %1002 = vmatprep.subr.mxu0 0.0
        %1003 = vmatpush1.msra.mxu0 0.0
        %1004 = vmatprep.subr.mxu0 0.0
        %1005 = vmatpush1.msra.mxu0 0.0
        %1006 = vmatprep.subr.mxu0 0.0
        %1007 = vmatpush1.msra.mxu0 0.0
        %1008 = vmatprep.subr.mxu0 0.0
        %1009 = vmatpush1.msra.mxu0 0.0
        %1010 = vmatprep.subr.mxu0 0.0
        %1011 = vmatpush1.msra.mxu0 0.0
        %1012 = vmatprep.subr.mxu0 0.0
        %1013 = vmatpush1.msra.mxu0 0.0
        %1014 = vmatprep.subr.mxu0 0.0
        %1015 = vmatpush1.msra.mxu0 0.0
        %1016 = vmatprep.subr.mxu0 0.0
        %1017 = vmatpush1.msra.mxu0 0.0
        %1018 = vmatprep.subr.mxu0 0.0
        %1019 = vmatpush1.msra.mxu0 0.0
        %1020 = vmatprep.subr.mxu0 0.0
        %1021 = vmatpush1.msra.mxu0 0.0
        %1022 = vmatprep.subr.mxu0 0.0
        %1023 = vmatpush1.msra.mxu0 0.0
        %1024 = vmatprep.subr.mxu0 0.0
        %1025 = vmatpush1.msra.mxu0 0.0
        %1026 = vmatprep.mubr.f32.mxu0 0.0
        %v1027 = vand.u32 %v488, 4294901760
        %v1028 = vsub.f32 %v488, %v1027
        %v1029 = vand.u32 %v1028, 4294901760
        %1030 = vmatmul.mubr.f32.gmra.mrb[0].mxu0 %v1029
        %v1031 = vpop.f32.mrb[0].mxu0
        %v1032 = vadd.f32 %v902, %v1031
        %v1033 = vpop.f32.mrb[0].mxu0
        %1034 = vmatprep.mubr.f32.mxu0 0.0
        %v1035 = vand.u32 %v491, 4294901760
        %v1036 = vsub.f32 %v491, %v1035
        %v1037 = vand.u32 %v1036, 4294901760
        %1038 = vmatmul.mubr.f32.gmra.mrb[0].mxu0 %v1037
        %v1039 = vpop.f32.mrb[0].mxu0
        %v1040 = vadd.f32 %v909, %v1039
        %v1041 = vpop.f32.mrb[0].mxu0
        %1042 = vmatprep.mubr.f32.mxu0 0.0
        %v1043 = vand.u32 %v494, 4294901760
        %v1044 = vsub.f32 %v494, %v1043
        %v1045 = vand.u32 %v1044, 4294901760
        %1046 = vmatmul.mubr.f32.gmra.mrb[0].mxu0 %v1045
        %v1047 = vpop.f32.mrb[0].mxu0
        %v1048 = vadd.f32 %v916, %v1047
        %v1049 = vpop.f32.mrb[0].mxu0
        %1050 = vmatprep.mubr.f32.mxu0 0.0
        %v1051 = vand.u32 %v497, 4294901760
        %v1052 = vsub.f32 %v497, %v1051
        %v1053 = vand.u32 %v1052, 4294901760
        %1054 = vmatmul.mubr.f32.gmra.mrb[0].mxu0 %v1053
        %v1055 = vpop.f32.mrb[0].mxu0
        %v1056 = vadd.f32 %v923, %v1055
        %v1057 = vpop.f32.mrb[0].mxu0
        %1058 = vmatprep.mubr.f32.mxu0 0.0
        %v1059 = vand.u32 %v500, 4294901760
        %v1060 = vsub.f32 %v500, %v1059
        %v1061 = vand.u32 %v1060, 4294901760
        %1062 = vmatmul.mubr.f32.gmra.mrb[0].mxu0 %v1061
        %v1063 = vpop.f32.mrb[0].mxu0
        %v1064 = vadd.f32 %v930, %v1063
        %v1065 = vpop.f32.mrb[0].mxu0
        %1066 = vmatprep.mubr.f32.mxu0 0.0
        %v1067 = vand.u32 %v503, 4294901760
        %v1068 = vsub.f32 %v503, %v1067
        %v1069 = vand.u32 %v1068, 4294901760
        %1070 = vmatmul.mubr.f32.gmra.mrb[0].mxu0 %v1069
        %v1071 = vpop.f32.mrb[0].mxu0
        %v1072 = vadd.f32 %v937, %v1071
        %v1073 = vpop.f32.mrb[0].mxu0
        %1074 = vmatprep.mubr.f32.mxu0 0.0
        %v1075 = vand.u32 %v506, 4294901760
        %v1076 = vsub.f32 %v506, %v1075
        %v1077 = vand.u32 %v1076, 4294901760
        %1078 = vmatmul.mubr.f32.gmra.mrb[0].mxu0 %v1077
        %v1079 = vpop.f32.mrb[0].mxu0
        %v1080 = vadd.f32 %v944, %v1079
        %v1081 = vpop.f32.mrb[0].mxu0
        %1082 = vmatprep.mubr.f32.mxu0 0.0
        %v1083 = vand.u32 %v509, 4294901760
        %v1084 = vsub.f32 %v509, %v1083
        %v1085 = vand.u32 %v1084, 4294901760
        %1086 = vmatmul.mubr.f32.gmra.mrb[0].mxu0 %v1085
        %v1087 = vpop.f32.mrb[0].mxu0
        %v1088 = vadd.f32 %v951, %v1087
        %v1089 = vpop.f32.mrb[0].mxu0
        %1090 = vdwg.mxu0
        %1091 = vmatprep.subr.mxu0 0.0
        %v1092 = vand.u32 %v479, 4294901760
        %v1093 = vsub.f32 %v479, %v1092
        %v1094 = vand.u32 %v1093, 4294901760
        %1095 = vmatpush1.msra.mxu0 %v1094
        %1096 = vmatprep.subr.mxu0 0.0
        %v1097 = vand.u32 %v480, 4294901760
        %v1098 = vsub.f32 %v480, %v1097
        %v1099 = vand.u32 %v1098, 4294901760
        %1100 = vmatpush1.msra.mxu0 %v1099
        %1101 = vmatprep.subr.mxu0 0.0
        %v1102 = vand.u32 %v481, 4294901760
        %v1103 = vsub.f32 %v481, %v1102
        %v1104 = vand.u32 %v1103, 4294901760
        %1105 = vmatpush1.msra.mxu0 %v1104
        %1106 = vmatprep.subr.mxu0 0.0
        %v1107 = vand.u32 %v482, 4294901760
        %v1108 = vsub.f32 %v482, %v1107
        %v1109 = vand.u32 %v1108, 4294901760
        %1110 = vmatpush1.msra.mxu0 %v1109
        %1111 = vmatprep.subr.mxu0 0.0
        %v1112 = vand.u32 %v483, 4294901760
        %v1113 = vsub.f32 %v483, %v1112
        %v1114 = vand.u32 %v1113, 4294901760
        %1115 = vmatpush1.msra.mxu0 %v1114
        %1116 = vmatprep.subr.mxu0 0.0
        %v1117 = vand.u32 %v484, 4294901760
        %v1118 = vsub.f32 %v484, %v1117
        %v1119 = vand.u32 %v1118, 4294901760
        %1120 = vmatpush1.msra.mxu0 %v1119
        %1121 = vmatprep.subr.mxu0 0.0
        %v1122 = vand.u32 %v485, 4294901760
        %v1123 = vsub.f32 %v485, %v1122
        %v1124 = vand.u32 %v1123, 4294901760
        %1125 = vmatpush1.msra.mxu0 %v1124
        %1126 = vmatprep.subr.mxu0 0.0
        %v1127 = vand.u32 %v486, 4294901760
        %v1128 = vsub.f32 %v486, %v1127
        %v1129 = vand.u32 %v1128, 4294901760
        %1130 = vmatpush1.msra.mxu0 %v1129
        %1131 = vmatprep.subr.mxu0 0.0
        %1132 = vmatpush1.msra.mxu0 0.0
        %1133 = vmatprep.subr.mxu0 0.0
        %1134 = vmatpush1.msra.mxu0 0.0
        %1135 = vmatprep.subr.mxu0 0.0
        %1136 = vmatpush1.msra.mxu0 0.0
        %1137 = vmatprep.subr.mxu0 0.0
        %1138 = vmatpush1.msra.mxu0 0.0
        %1139 = vmatprep.subr.mxu0 0.0
        %1140 = vmatpush1.msra.mxu0 0.0
        %1141 = vmatprep.subr.mxu0 0.0
        %1142 = vmatpush1.msra.mxu0 0.0
        %1143 = vmatprep.subr.mxu0 0.0
        %1144 = vmatpush1.msra.mxu0 0.0
        %1145 = vmatprep.subr.mxu0 0.0
        %1146 = vmatpush1.msra.mxu0 0.0
        %1147 = vmatprep.subr.mxu0 0.0
        %1148 = vmatpush1.msra.mxu0 0.0
        %1149 = vmatprep.subr.mxu0 0.0
        %1150 = vmatpush1.msra.mxu0 0.0
        %1151 = vmatprep.subr.mxu0 0.0
        %1152 = vmatpush1.msra.mxu0 0.0
        %1153 = vmatprep.subr.mxu0 0.0
        %1154 = vmatpush1.msra.mxu0 0.0
        %1155 = vmatprep.subr.mxu0 0.0
        %1156 = vmatpush1.msra.mxu0 0.0
        %1157 = vmatprep.subr.mxu0 0.0
        %1158 = vmatpush1.msra.mxu0 0.0
        %1159 = vmatprep.subr.mxu0 0.0
        %1160 = vmatpush1.msra.mxu0 0.0
        %1161 = vmatprep.subr.mxu0 0.0
        %1162 = vmatpush1.msra.mxu0 0.0
        %1163 = vmatprep.subr.mxu0 0.0
        %1164 = vmatpush1.msra.mxu0 0.0
        %1165 = vmatprep.subr.mxu0 0.0
        %1166 = vmatpush1.msra.mxu0 0.0
        %1167 = vmatprep.subr.mxu0 0.0
        %1168 = vmatpush1.msra.mxu0 0.0
        %1169 = vmatprep.subr.mxu0 0.0
        %1170 = vmatpush1.msra.mxu0 0.0
        %1171 = vmatprep.subr.mxu0 0.0
        %1172 = vmatpush1.msra.mxu0 0.0
        %1173 = vmatprep.subr.mxu0 0.0
        %1174 = vmatpush1.msra.mxu0 0.0
        %1175 = vmatprep.subr.mxu0 0.0
        %1176 = vmatpush1.msra.mxu0 0.0
        %1177 = vmatprep.subr.mxu0 0.0
        %1178 = vmatpush1.msra.mxu0 0.0
        %1179 = vmatprep.mubr.f32.mxu0 0.0
        %v1180 = vand.u32 %v488, 4294901760
        %1181 = vmatmul.mubr.f32.gmra.mrb[0].mxu0 %v1180
        %v1182 = vpop.f32.mrb[0].mxu0
        %v1183 = vadd.f32 %v1032, %v1182
        %v1184 = vpop.f32.mrb[0].mxu0
        %1185 = vmatprep.mubr.f32.mxu0 0.0
        %v1186 = vand.u32 %v491, 4294901760
        %1187 = vmatmul.mubr.f32.gmra.mrb[0].mxu0 %v1186
        %v1188 = vpop.f32.mrb[0].mxu0
        %v1189 = vadd.f32 %v1040, %v1188
        %v1190 = vpop.f32.mrb[0].mxu0
        %1191 = vmatprep.mubr.f32.mxu0 0.0
        %v1192 = vand.u32 %v494, 4294901760
        %1193 = vmatmul.mubr.f32.gmra.mrb[0].mxu0 %v1192
        %v1194 = vpop.f32.mrb[0].mxu0
        %v1195 = vadd.f32 %v1048, %v1194
        %v1196 = vpop.f32.mrb[0].mxu0
        %1197 = vmatprep.mubr.f32.mxu0 0.0
        %v1198 = vand.u32 %v497, 4294901760
        %1199 = vmatmul.mubr.f32.gmra.mrb[0].mxu0 %v1198
        %v1200 = vpop.f32.mrb[0].mxu0
        %v1201 = vadd.f32 %v1056, %v1200
        %v1202 = vpop.f32.mrb[0].mxu0
        %1203 = vmatprep.mubr.f32.mxu0 0.0
        %v1204 = vand.u32 %v500, 4294901760
        %1205 = vmatmul.mubr.f32.gmra.mrb[0].mxu0 %v1204
        %v1206 = vpop.f32.mrb[0].mxu0
        %v1207 = vadd.f32 %v1064, %v1206
        %v1208 = vpop.f32.mrb[0].mxu0
        %1209 = vmatprep.mubr.f32.mxu0 0.0
        %v1210 = vand.u32 %v503, 4294901760
        %1211 = vmatmul.mubr.f32.gmra.mrb[0].mxu0 %v1210
        %v1212 = vpop.f32.mrb[0].mxu0
        %v1213 = vadd.f32 %v1072, %v1212
        %v1214 = vpop.f32.mrb[0].mxu0
        %1215 = vmatprep.mubr.f32.mxu0 0.0
        %v1216 = vand.u32 %v506, 4294901760
        %1217 = vmatmul.mubr.f32.gmra.mrb[0].mxu0 %v1216
        %v1218 = vpop.f32.mrb[0].mxu0
        %v1219 = vadd.f32 %v1080, %v1218
        %v1220 = vpop.f32.mrb[0].mxu0
        %1221 = vmatprep.mubr.f32.mxu0 0.0
        %v1222 = vand.u32 %v509, 4294901760
        %1223 = vmatmul.mubr.f32.gmra.mrb[0].mxu0 %v1222
        %v1224 = vpop.f32.mrb[0].mxu0
        %v1225 = vadd.f32 %v1088, %v1224
        %v1226 = vpop.f32.mrb[0].mxu0
        %1227 = vdwg.mxu0
        %1228 = vmatprep.subr.mxu0 0.0
        %v1229 = vand.u32 %v479, 4294901760
        %1230 = vmatpush1.msra.mxu0 %v1229
        %1231 = vmatprep.subr.mxu0 0.0
        %v1232 = vand.u32 %v480, 4294901760
        %1233 = vmatpush1.msra.mxu0 %v1232
        %1234 = vmatprep.subr.mxu0 0.0
        %v1235 = vand.u32 %v481, 4294901760
        %1236 = vmatpush1.msra.mxu0 %v1235
        %1237 = vmatprep.subr.mxu0 0.0
        %v1238 = vand.u32 %v482, 4294901760
        %1239 = vmatpush1.msra.mxu0 %v1238
        %1240 = vmatprep.subr.mxu0 0.0
        %v1241 = vand.u32 %v483, 4294901760
        %1242 = vmatpush1.msra.mxu0 %v1241
        %1243 = vmatprep.subr.mxu0 0.0
        %v1244 = vand.u32 %v484, 4294901760
        %1245 = vmatpush1.msra.mxu0 %v1244
        %1246 = vmatprep.subr.mxu0 0.0
        %v1247 = vand.u32 %v485, 4294901760
        %1248 = vmatpush1.msra.mxu0 %v1247
        %1249 = vmatprep.subr.mxu0 0.0
        %v1250 = vand.u32 %v486, 4294901760
        %1251 = vmatpush1.msra.mxu0 %v1250
        %1252 = vmatprep.subr.mxu0 0.0
        %1253 = vmatpush1.msra.mxu0 0.0
        %1254 = vmatprep.subr.mxu0 0.0
        %1255 = vmatpush1.msra.mxu0 0.0
        %1256 = vmatprep.subr.mxu0 0.0
        %1257 = vmatpush1.msra.mxu0 0.0
        %1258 = vmatprep.subr.mxu0 0.0
        %1259 = vmatpush1.msra.mxu0 0.0
        %1260 = vmatprep.subr.mxu0 0.0
        %1261 = vmatpush1.msra.mxu0 0.0
        %1262 = vmatprep.subr.mxu0 0.0
        %1263 = vmatpush1.msra.mxu0 0.0
        %1264 = vmatprep.subr.mxu0 0.0
        %1265 = vmatpush1.msra.mxu0 0.0
        %1266 = vmatprep.subr.mxu0 0.0
        %1267 = vmatpush1.msra.mxu0 0.0
        %1268 = vmatprep.subr.mxu0 0.0
        %1269 = vmatpush1.msra.mxu0 0.0
        %1270 = vmatprep.subr.mxu0 0.0
        %1271 = vmatpush1.msra.mxu0 0.0
        %1272 = vmatprep.subr.mxu0 0.0
        %1273 = vmatpush1.msra.mxu0 0.0
        %1274 = vmatprep.subr.mxu0 0.0
        %1275 = vmatpush1.msra.mxu0 0.0
        %1276 = vmatprep.subr.mxu0 0.0
        %1277 = vmatpush1.msra.mxu0 0.0
        %1278 = vmatprep.subr.mxu0 0.0
        %1279 = vmatpush1.msra.mxu0 0.0
        %1280 = vmatprep.subr.mxu0 0.0
        %1281 = vmatpush1.msra.mxu0 0.0
        %1282 = vmatprep.subr.mxu0 0.0
        %1283 = vmatpush1.msra.mxu0 0.0
        %1284 = vmatprep.subr.mxu0 0.0
        %1285 = vmatpush1.msra.mxu0 0.0
        %1286 = vmatprep.subr.mxu0 0.0
        %1287 = vmatpush1.msra.mxu0 0.0
        %1288 = vmatprep.subr.mxu0 0.0
        %1289 = vmatpush1.msra.mxu0 0.0
        %1290 = vmatprep.subr.mxu0 0.0
        %1291 = vmatpush1.msra.mxu0 0.0
        %1292 = vmatprep.subr.mxu0 0.0
        %1293 = vmatpush1.msra.mxu0 0.0
        %1294 = vmatprep.subr.mxu0 0.0
        %1295 = vmatpush1.msra.mxu0 0.0
        %1296 = vmatprep.subr.mxu0 0.0
        %1297 = vmatpush1.msra.mxu0 0.0
        %1298 = vmatprep.subr.mxu0 0.0
        %1299 = vmatpush1.msra.mxu0 0.0
        %1300 = vmatprep.mubr.f32.mxu0 0.0
        %v1301 = vand.u32 %v488, 4294901760
        %1302 = vmatmul.mubr.f32.gmra.mrb[0].mxu0 %v1301
        %v1303 = vpop.f32.mrb[0].mxu0
        %v1304 = vadd.f32 %v1183, %v1303
        %v1305 = vpop.f32.mrb[0].mxu0
        %1306 = vmatprep.mubr.f32.mxu0 0.0
        %v1307 = vand.u32 %v491, 4294901760
        %1308 = vmatmul.mubr.f32.gmra.mrb[0].mxu0 %v1307
        %v1309 = vpop.f32.mrb[0].mxu0
        %v1310 = vadd.f32 %v1189, %v1309
        %v1311 = vpop.f32.mrb[0].mxu0
        %1312 = vmatprep.mubr.f32.mxu0 0.0
        %v1313 = vand.u32 %v494, 4294901760
        %1314 = vmatmul.mubr.f32.gmra.mrb[0].mxu0 %v1313
        %v1315 = vpop.f32.mrb[0].mxu0
        %v1316 = vadd.f32 %v1195, %v1315
        %v1317 = vpop.f32.mrb[0].mxu0
        %1318 = vmatprep.mubr.f32.mxu0 0.0
        %v1319 = vand.u32 %v497, 4294901760
        %1320 = vmatmul.mubr.f32.gmra.mrb[0].mxu0 %v1319
        %v1321 = vpop.f32.mrb[0].mxu0
        %v1322 = vadd.f32 %v1201, %v1321
        %v1323 = vpop.f32.mrb[0].mxu0
        %1324 = vmatprep.mubr.f32.mxu0 0.0
        %v1325 = vand.u32 %v500, 4294901760
        %1326 = vmatmul.mubr.f32.gmra.mrb[0].mxu0 %v1325
        %v1327 = vpop.f32.mrb[0].mxu0
        %v1328 = vadd.f32 %v1207, %v1327
        %v1329 = vpop.f32.mrb[0].mxu0
        %1330 = vmatprep.mubr.f32.mxu0 0.0
        %v1331 = vand.u32 %v503, 4294901760
        %1332 = vmatmul.mubr.f32.gmra.mrb[0].mxu0 %v1331
        %v1333 = vpop.f32.mrb[0].mxu0
        %v1334 = vadd.f32 %v1213, %v1333
        %v1335 = vpop.f32.mrb[0].mxu0
        %1336 = vmatprep.mubr.f32.mxu0 0.0
        %v1337 = vand.u32 %v506, 4294901760
        %1338 = vmatmul.mubr.f32.gmra.mrb[0].mxu0 %v1337
        %v1339 = vpop.f32.mrb[0].mxu0
        %v1340 = vadd.f32 %v1219, %v1339
        %v1341 = vpop.f32.mrb[0].mxu0
        %1342 = vmatprep.mubr.f32.mxu0 0.0
        %v1343 = vand.u32 %v509, 4294901760
        %1344 = vmatmul.mubr.f32.gmra.mrb[0].mxu0 %v1343
        %v1345 = vpop.f32.mrb[0].mxu0
        %v1346 = vadd.f32 %v1225, %v1345
        %v1347 = vpop.f32.mrb[0].mxu0
        %1348 = vdwg.mxu0
        %v1350 = vsel %vm294, %v277, 0
        %v1353 = vsel %vm294, %v278, 0
        %v1356 = vsel %vm294, %v279, 0
        %v1359 = vsel %vm294, %v280, 0
        %v1362 = vsel %vm294, %v281, 0
        %v1365 = vsel %vm294, %v282, 0
        %v1368 = vsel %vm294, %v283, 0
        %v1371 = vsel %vm294, %v284, 0
        %1373 = vmatprep.subr.mxu0 0.0
        %v1374 = vand.u32 %v471, 4294901760
        %1375 = vmatpush1.msra.mxu0 %v1374
        %1376 = vmatprep.subr.mxu0 0.0
        %v1377 = vand.u32 %v472, 4294901760
        %1378 = vmatpush1.msra.mxu0 %v1377
        %1379 = vmatprep.subr.mxu0 0.0
        %v1380 = vand.u32 %v473, 4294901760
        %1381 = vmatpush1.msra.mxu0 %v1380
        %1382 = vmatprep.subr.mxu0 0.0
        %v1383 = vand.u32 %v474, 4294901760
        %1384 = vmatpush1.msra.mxu0 %v1383
        %1385 = vmatprep.subr.mxu0 0.0
        %v1386 = vand.u32 %v475, 4294901760
        %1387 = vmatpush1.msra.mxu0 %v1386
        %1388 = vmatprep.subr.mxu0 0.0
        %v1389 = vand.u32 %v476, 4294901760
        %1390 = vmatpush1.msra.mxu0 %v1389
        %1391 = vmatprep.subr.mxu0 0.0
        %v1392 = vand.u32 %v477, 4294901760
        %1393 = vmatpush1.msra.mxu0 %v1392
        %1394 = vmatprep.subr.mxu0 0.0
        %v1395 = vand.u32 %v478, 4294901760
        %1396 = vmatpush1.msra.mxu0 %v1395
        %1397 = vmatprep.subr.mxu0 0.0
        %1398 = vmatpush1.msra.mxu0 0.0
        %1399 = vmatprep.subr.mxu0 0.0
        %1400 = vmatpush1.msra.mxu0 0.0
        %1401 = vmatprep.subr.mxu0 0.0
        %1402 = vmatpush1.msra.mxu0 0.0
        %1403 = vmatprep.subr.mxu0 0.0
        %1404 = vmatpush1.msra.mxu0 0.0
        %1405 = vmatprep.subr.mxu0 0.0
        %1406 = vmatpush1.msra.mxu0 0.0
        %1407 = vmatprep.subr.mxu0 0.0
        %1408 = vmatpush1.msra.mxu0 0.0
        %1409 = vmatprep.subr.mxu0 0.0
        %1410 = vmatpush1.msra.mxu0 0.0
        %1411 = vmatprep.subr.mxu0 0.0
        %1412 = vmatpush1.msra.mxu0 0.0
        %1413 = vmatprep.subr.mxu0 0.0
        %1414 = vmatpush1.msra.mxu0 0.0
        %1415 = vmatprep.subr.mxu0 0.0
        %1416 = vmatpush1.msra.mxu0 0.0
        %1417 = vmatprep.subr.mxu0 0.0
        %1418 = vmatpush1.msra.mxu0 0.0
        %1419 = vmatprep.subr.mxu0 0.0
        %1420 = vmatpush1.msra.mxu0 0.0
        %1421 = vmatprep.subr.mxu0 0.0
        %1422 = vmatpush1.msra.mxu0 0.0
        %1423 = vmatprep.subr.mxu0 0.0
        %1424 = vmatpush1.msra.mxu0 0.0
        %1425 = vmatprep.subr.mxu0 0.0
        %1426 = vmatpush1.msra.mxu0 0.0
        %1427 = vmatprep.subr.mxu0 0.0
        %1428 = vmatpush1.msra.mxu0 0.0
        %1429 = vmatprep.subr.mxu0 0.0
        %1430 = vmatpush1.msra.mxu0 0.0
        %1431 = vmatprep.subr.mxu0 0.0
        %1432 = vmatpush1.msra.mxu0 0.0
        %1433 = vmatprep.subr.mxu0 0.0
        %1434 = vmatpush1.msra.mxu0 0.0
        %1435 = vmatprep.subr.mxu0 0.0
        %1436 = vmatpush1.msra.mxu0 0.0
        %1437 = vmatprep.subr.mxu0 0.0
        %1438 = vmatpush1.msra.mxu0 0.0
        %1439 = vmatprep.subr.mxu0 0.0
        %1440 = vmatpush1.msra.mxu0 0.0
        %1441 = vmatprep.subr.mxu0 0.0
        %1442 = vmatpush1.msra.mxu0 0.0
        %1443 = vmatprep.subr.mxu0 0.0
        %1444 = vmatpush1.msra.mxu0 0.0
        %1445 = vmatprep.mubr.f32.mxu0 0.0
        %v1446 = vand.u32 %v1350, 4294901760
        %v1447 = vsub.f32 %v1350, %v1446
        %v1448 = vand.u32 %v1447, 4294901760
        %v1449 = vsub.f32 %v1447, %v1448
        %v1450 = vand.u32 %v1449, 4294901760
        %1451 = vmatmul.mubr.f32.gmra.mrb[0].mxu0 %v1450
        %v1452 = vpop.f32.mrb[0].mxu0
        %v1453 = vadd.f32 %v1304, %v1452
        %v1454 = vpop.f32.mrb[0].mxu0
        %1455 = vmatprep.mubr.f32.mxu0 0.0
        %v1456 = vand.u32 %v1353, 4294901760
        %v1457 = vsub.f32 %v1353, %v1456
        %v1458 = vand.u32 %v1457, 4294901760
        %v1459 = vsub.f32 %v1457, %v1458
        %v1460 = vand.u32 %v1459, 4294901760
        %1461 = vmatmul.mubr.f32.gmra.mrb[0].mxu0 %v1460
        %v1462 = vpop.f32.mrb[0].mxu0
        %v1463 = vadd.f32 %v1310, %v1462
        %v1464 = vpop.f32.mrb[0].mxu0
        %1465 = vmatprep.mubr.f32.mxu0 0.0
        %v1466 = vand.u32 %v1356, 4294901760
        %v1467 = vsub.f32 %v1356, %v1466
        %v1468 = vand.u32 %v1467, 4294901760
        %v1469 = vsub.f32 %v1467, %v1468
        %v1470 = vand.u32 %v1469, 4294901760
        %1471 = vmatmul.mubr.f32.gmra.mrb[0].mxu0 %v1470
        %v1472 = vpop.f32.mrb[0].mxu0
        %v1473 = vadd.f32 %v1316, %v1472
        %v1474 = vpop.f32.mrb[0].mxu0
        %1475 = vmatprep.mubr.f32.mxu0 0.0
        %v1476 = vand.u32 %v1359, 4294901760
        %v1477 = vsub.f32 %v1359, %v1476
        %v1478 = vand.u32 %v1477, 4294901760
        %v1479 = vsub.f32 %v1477, %v1478
        %v1480 = vand.u32 %v1479, 4294901760
        %1481 = vmatmul.mubr.f32.gmra.mrb[0].mxu0 %v1480
        %v1482 = vpop.f32.mrb[0].mxu0
        %v1483 = vadd.f32 %v1322, %v1482
        %v1484 = vpop.f32.mrb[0].mxu0
        %1485 = vmatprep.mubr.f32.mxu0 0.0
        %v1486 = vand.u32 %v1362, 4294901760
        %v1487 = vsub.f32 %v1362, %v1486
        %v1488 = vand.u32 %v1487, 4294901760
        %v1489 = vsub.f32 %v1487, %v1488
        %v1490 = vand.u32 %v1489, 4294901760
        %1491 = vmatmul.mubr.f32.gmra.mrb[0].mxu0 %v1490
        %v1492 = vpop.f32.mrb[0].mxu0
        %v1493 = vadd.f32 %v1328, %v1492
        %v1494 = vpop.f32.mrb[0].mxu0
        %1495 = vmatprep.mubr.f32.mxu0 0.0
        %v1496 = vand.u32 %v1365, 4294901760
        %v1497 = vsub.f32 %v1365, %v1496
        %v1498 = vand.u32 %v1497, 4294901760
        %v1499 = vsub.f32 %v1497, %v1498
        %v1500 = vand.u32 %v1499, 4294901760
        %1501 = vmatmul.mubr.f32.gmra.mrb[0].mxu0 %v1500
        %v1502 = vpop.f32.mrb[0].mxu0
        %v1503 = vadd.f32 %v1334, %v1502
        %v1504 = vpop.f32.mrb[0].mxu0
        %1505 = vmatprep.mubr.f32.mxu0 0.0
        %v1506 = vand.u32 %v1368, 4294901760
        %v1507 = vsub.f32 %v1368, %v1506
        %v1508 = vand.u32 %v1507, 4294901760
        %v1509 = vsub.f32 %v1507, %v1508
        %v1510 = vand.u32 %v1509, 4294901760
        %1511 = vmatmul.mubr.f32.gmra.mrb[0].mxu0 %v1510
        %v1512 = vpop.f32.mrb[0].mxu0
        %v1513 = vadd.f32 %v1340, %v1512
        %v1514 = vpop.f32.mrb[0].mxu0
        %1515 = vmatprep.mubr.f32.mxu0 0.0
        %v1516 = vand.u32 %v1371, 4294901760
        %v1517 = vsub.f32 %v1371, %v1516
        %v1518 = vand.u32 %v1517, 4294901760
        %v1519 = vsub.f32 %v1517, %v1518
        %v1520 = vand.u32 %v1519, 4294901760
        %1521 = vmatmul.mubr.f32.gmra.mrb[0].mxu0 %v1520
        %v1522 = vpop.f32.mrb[0].mxu0
        %v1523 = vadd.f32 %v1346, %v1522
        %v1524 = vpop.f32.mrb[0].mxu0
        %1525 = vdwg.mxu0
        %1526 = vmatprep.subr.mxu0 0.0
        %v1527 = vand.u32 %v471, 4294901760
        %v1528 = vsub.f32 %v471, %v1527
        %v1529 = vand.u32 %v1528, 4294901760
        %v1530 = vsub.f32 %v1528, %v1529
        %v1531 = vand.u32 %v1530, 4294901760
        %1532 = vmatpush1.msra.mxu0 %v1531
        %1533 = vmatprep.subr.mxu0 0.0
        %v1534 = vand.u32 %v472, 4294901760
        %v1535 = vsub.f32 %v472, %v1534
        %v1536 = vand.u32 %v1535, 4294901760
        %v1537 = vsub.f32 %v1535, %v1536
        %v1538 = vand.u32 %v1537, 4294901760
        %1539 = vmatpush1.msra.mxu0 %v1538
        %1540 = vmatprep.subr.mxu0 0.0
        %v1541 = vand.u32 %v473, 4294901760
        %v1542 = vsub.f32 %v473, %v1541
        %v1543 = vand.u32 %v1542, 4294901760
        %v1544 = vsub.f32 %v1542, %v1543
        %v1545 = vand.u32 %v1544, 4294901760
        %1546 = vmatpush1.msra.mxu0 %v1545
        %1547 = vmatprep.subr.mxu0 0.0
        %v1548 = vand.u32 %v474, 4294901760
        %v1549 = vsub.f32 %v474, %v1548
        %v1550 = vand.u32 %v1549, 4294901760
        %v1551 = vsub.f32 %v1549, %v1550
        %v1552 = vand.u32 %v1551, 4294901760
        %1553 = vmatpush1.msra.mxu0 %v1552
        %1554 = vmatprep.subr.mxu0 0.0
        %v1555 = vand.u32 %v475, 4294901760
        %v1556 = vsub.f32 %v475, %v1555
        %v1557 = vand.u32 %v1556, 4294901760
        %v1558 = vsub.f32 %v1556, %v1557
        %v1559 = vand.u32 %v1558, 4294901760
        %1560 = vmatpush1.msra.mxu0 %v1559
        %1561 = vmatprep.subr.mxu0 0.0
        %v1562 = vand.u32 %v476, 4294901760
        %v1563 = vsub.f32 %v476, %v1562
        %v1564 = vand.u32 %v1563, 4294901760
        %v1565 = vsub.f32 %v1563, %v1564
        %v1566 = vand.u32 %v1565, 4294901760
        %1567 = vmatpush1.msra.mxu0 %v1566
        %1568 = vmatprep.subr.mxu0 0.0
        %v1569 = vand.u32 %v477, 4294901760
        %v1570 = vsub.f32 %v477, %v1569
        %v1571 = vand.u32 %v1570, 4294901760
        %v1572 = vsub.f32 %v1570, %v1571
        %v1573 = vand.u32 %v1572, 4294901760
        %1574 = vmatpush1.msra.mxu0 %v1573
        %1575 = vmatprep.subr.mxu0 0.0
        %v1576 = vand.u32 %v478, 4294901760
        %v1577 = vsub.f32 %v478, %v1576
        %v1578 = vand.u32 %v1577, 4294901760
        %v1579 = vsub.f32 %v1577, %v1578
        %v1580 = vand.u32 %v1579, 4294901760
        %1581 = vmatpush1.msra.mxu0 %v1580
        %1582 = vmatprep.subr.mxu0 0.0
        %1583 = vmatpush1.msra.mxu0 0.0
        %1584 = vmatprep.subr.mxu0 0.0
        %1585 = vmatpush1.msra.mxu0 0.0
        %1586 = vmatprep.subr.mxu0 0.0
        %1587 = vmatpush1.msra.mxu0 0.0
        %1588 = vmatprep.subr.mxu0 0.0
        %1589 = vmatpush1.msra.mxu0 0.0
        %1590 = vmatprep.subr.mxu0 0.0
        %1591 = vmatpush1.msra.mxu0 0.0
        %1592 = vmatprep.subr.mxu0 0.0
        %1593 = vmatpush1.msra.mxu0 0.0
        %1594 = vmatprep.subr.mxu0 0.0
        %1595 = vmatpush1.msra.mxu0 0.0
        %1596 = vmatprep.subr.mxu0 0.0
        %1597 = vmatpush1.msra.mxu0 0.0
        %1598 = vmatprep.subr.mxu0 0.0
        %1599 = vmatpush1.msra.mxu0 0.0
        %1600 = vmatprep.subr.mxu0 0.0
        %1601 = vmatpush1.msra.mxu0 0.0
        %1602 = vmatprep.subr.mxu0 0.0
        %1603 = vmatpush1.msra.mxu0 0.0
        %1604 = vmatprep.subr.mxu0 0.0
        %1605 = vmatpush1.msra.mxu0 0.0
        %1606 = vmatprep.subr.mxu0 0.0
        %1607 = vmatpush1.msra.mxu0 0.0
        %1608 = vmatprep.subr.mxu0 0.0
        %1609 = vmatpush1.msra.mxu0 0.0
        %1610 = vmatprep.subr.mxu0 0.0
        %1611 = vmatpush1.msra.mxu0 0.0
        %1612 = vmatprep.subr.mxu0 0.0
        %1613 = vmatpush1.msra.mxu0 0.0
        %1614 = vmatprep.subr.mxu0 0.0
        %1615 = vmatpush1.msra.mxu0 0.0
        %1616 = vmatprep.subr.mxu0 0.0
        %1617 = vmatpush1.msra.mxu0 0.0
        %1618 = vmatprep.subr.mxu0 0.0
        %1619 = vmatpush1.msra.mxu0 0.0
        %1620 = vmatprep.subr.mxu0 0.0
        %1621 = vmatpush1.msra.mxu0 0.0
        %1622 = vmatprep.subr.mxu0 0.0
        %1623 = vmatpush1.msra.mxu0 0.0
        %1624 = vmatprep.subr.mxu0 0.0
        %1625 = vmatpush1.msra.mxu0 0.0
        %1626 = vmatprep.subr.mxu0 0.0
        %1627 = vmatpush1.msra.mxu0 0.0
        %1628 = vmatprep.subr.mxu0 0.0
        %1629 = vmatpush1.msra.mxu0 0.0
        %1630 = vmatprep.mubr.f32.mxu0 0.0
        %v1631 = vand.u32 %v1350, 4294901760
        %1632 = vmatmul.mubr.f32.gmra.mrb[0].mxu0 %v1631
        %v1633 = vpop.f32.mrb[0].mxu0
        %v1634 = vadd.f32 %v1453, %v1633
        %v1635 = vpop.f32.mrb[0].mxu0
        %1636 = vmatprep.mubr.f32.mxu0 0.0
        %v1637 = vand.u32 %v1353, 4294901760
        %1638 = vmatmul.mubr.f32.gmra.mrb[0].mxu0 %v1637
        %v1639 = vpop.f32.mrb[0].mxu0
        %v1640 = vadd.f32 %v1463, %v1639
        %v1641 = vpop.f32.mrb[0].mxu0
        %1642 = vmatprep.mubr.f32.mxu0 0.0
        %v1643 = vand.u32 %v1356, 4294901760
        %1644 = vmatmul.mubr.f32.gmra.mrb[0].mxu0 %v1643
        %v1645 = vpop.f32.mrb[0].mxu0
        %v1646 = vadd.f32 %v1473, %v1645
        %v1647 = vpop.f32.mrb[0].mxu0
        %1648 = vmatprep.mubr.f32.mxu0 0.0
        %v1649 = vand.u32 %v1359, 4294901760
        %1650 = vmatmul.mubr.f32.gmra.mrb[0].mxu0 %v1649
        %v1651 = vpop.f32.mrb[0].mxu0
        %v1652 = vadd.f32 %v1483, %v1651
        %v1653 = vpop.f32.mrb[0].mxu0
        %1654 = vmatprep.mubr.f32.mxu0 0.0
        %v1655 = vand.u32 %v1362, 4294901760
        %1656 = vmatmul.mubr.f32.gmra.mrb[0].mxu0 %v1655
        %v1657 = vpop.f32.mrb[0].mxu0
        %v1658 = vadd.f32 %v1493, %v1657
        %v1659 = vpop.f32.mrb[0].mxu0
        %1660 = vmatprep.mubr.f32.mxu0 0.0
        %v1661 = vand.u32 %v1365, 4294901760
        %1662 = vmatmul.mubr.f32.gmra.mrb[0].mxu0 %v1661
        %v1663 = vpop.f32.mrb[0].mxu0
        %v1664 = vadd.f32 %v1503, %v1663
        %v1665 = vpop.f32.mrb[0].mxu0
        %1666 = vmatprep.mubr.f32.mxu0 0.0
        %v1667 = vand.u32 %v1368, 4294901760
        %1668 = vmatmul.mubr.f32.gmra.mrb[0].mxu0 %v1667
        %v1669 = vpop.f32.mrb[0].mxu0
        %v1670 = vadd.f32 %v1513, %v1669
        %v1671 = vpop.f32.mrb[0].mxu0
        %1672 = vmatprep.mubr.f32.mxu0 0.0
        %v1673 = vand.u32 %v1371, 4294901760
        %1674 = vmatmul.mubr.f32.gmra.mrb[0].mxu0 %v1673
        %v1675 = vpop.f32.mrb[0].mxu0
        %v1676 = vadd.f32 %v1523, %v1675
        %v1677 = vpop.f32.mrb[0].mxu0
        %1678 = vdwg.mxu0
        %1679 = vmatprep.subr.mxu0 0.0
        %v1680 = vand.u32 %v471, 4294901760
        %v1681 = vsub.f32 %v471, %v1680
        %1682 = vmatpush1.msra.mxu0 %v1681
        %1683 = vmatprep.subr.mxu0 0.0
        %v1684 = vand.u32 %v472, 4294901760
        %v1685 = vsub.f32 %v472, %v1684
        %1686 = vmatpush1.msra.mxu0 %v1685
        %1687 = vmatprep.subr.mxu0 0.0
        %v1688 = vand.u32 %v473, 4294901760
        %v1689 = vsub.f32 %v473, %v1688
        %1690 = vmatpush1.msra.mxu0 %v1689
        %1691 = vmatprep.subr.mxu0 0.0
        %v1692 = vand.u32 %v474, 4294901760
        %v1693 = vsub.f32 %v474, %v1692
        %1694 = vmatpush1.msra.mxu0 %v1693
        %1695 = vmatprep.subr.mxu0 0.0
        %v1696 = vand.u32 %v475, 4294901760
        %v1697 = vsub.f32 %v475, %v1696
        %1698 = vmatpush1.msra.mxu0 %v1697
        %1699 = vmatprep.subr.mxu0 0.0
        %v1700 = vand.u32 %v476, 4294901760
        %v1701 = vsub.f32 %v476, %v1700
        %1702 = vmatpush1.msra.mxu0 %v1701
        %1703 = vmatprep.subr.mxu0 0.0
        %v1704 = vand.u32 %v477, 4294901760
        %v1705 = vsub.f32 %v477, %v1704
        %1706 = vmatpush1.msra.mxu0 %v1705
        %1707 = vmatprep.subr.mxu0 0.0
        %v1708 = vand.u32 %v478, 4294901760
        %v1709 = vsub.f32 %v478, %v1708
        %1710 = vmatpush1.msra.mxu0 %v1709
        %1711 = vmatprep.subr.mxu0 0.0
        %1712 = vmatpush1.msra.mxu0 0.0
        %1713 = vmatprep.subr.mxu0 0.0
        %1714 = vmatpush1.msra.mxu0 0.0
        %1715 = vmatprep.subr.mxu0 0.0
        %1716 = vmatpush1.msra.mxu0 0.0
        %1717 = vmatprep.subr.mxu0 0.0
        %1718 = vmatpush1.msra.mxu0 0.0
        %1719 = vmatprep.subr.mxu0 0.0
        %1720 = vmatpush1.msra.mxu0 0.0
        %1721 = vmatprep.subr.mxu0 0.0
        %1722 = vmatpush1.msra.mxu0 0.0
        %1723 = vmatprep.subr.mxu0 0.0
        %1724 = vmatpush1.msra.mxu0 0.0
        %1725 = vmatprep.subr.mxu0 0.0
        %1726 = vmatpush1.msra.mxu0 0.0
        %1727 = vmatprep.subr.mxu0 0.0
        %1728 = vmatpush1.msra.mxu0 0.0
        %1729 = vmatprep.subr.mxu0 0.0
        %1730 = vmatpush1.msra.mxu0 0.0
        %1731 = vmatprep.subr.mxu0 0.0
        %1732 = vmatpush1.msra.mxu0 0.0
        %1733 = vmatprep.subr.mxu0 0.0
        %1734 = vmatpush1.msra.mxu0 0.0
        %1735 = vmatprep.subr.mxu0 0.0
        %1736 = vmatpush1.msra.mxu0 0.0
        %1737 = vmatprep.subr.mxu0 0.0
        %1738 = vmatpush1.msra.mxu0 0.0
        %1739 = vmatprep.subr.mxu0 0.0
        %1740 = vmatpush1.msra.mxu0 0.0
        %1741 = vmatprep.subr.mxu0 0.0
        %1742 = vmatpush1.msra.mxu0 0.0
        %1743 = vmatprep.subr.mxu0 0.0
        %1744 = vmatpush1.msra.mxu0 0.0
        %1745 = vmatprep.subr.mxu0 0.0
        %1746 = vmatpush1.msra.mxu0 0.0
        %1747 = vmatprep.subr.mxu0 0.0
        %1748 = vmatpush1.msra.mxu0 0.0
        %1749 = vmatprep.subr.mxu0 0.0
        %1750 = vmatpush1.msra.mxu0 0.0
        %1751 = vmatprep.subr.mxu0 0.0
        %1752 = vmatpush1.msra.mxu0 0.0
        %1753 = vmatprep.subr.mxu0 0.0
        %1754 = vmatpush1.msra.mxu0 0.0
        %1755 = vmatprep.subr.mxu0 0.0
        %1756 = vmatpush1.msra.mxu0 0.0
        %1757 = vmatprep.subr.mxu0 0.0
        %1758 = vmatpush1.msra.mxu0 0.0
        %1759 = vmatprep.mubr.f32.mxu0 0.0
        %v1760 = vand.u32 %v1350, 4294901760
        %v1761 = vsub.f32 %v1350, %v1760
        %1762 = vmatmul.mubr.f32.gmra.mrb[0].mxu0 %v1761
        %v1763 = vpop.f32.mrb[0].mxu0
        %v1764 = vadd.f32 %v1634, %v1763
        %v1765 = vpop.f32.mrb[0].mxu0
        %1766 = vmatprep.mubr.f32.mxu0 0.0
        %v1767 = vand.u32 %v1353, 4294901760
        %v1768 = vsub.f32 %v1353, %v1767
        %1769 = vmatmul.mubr.f32.gmra.mrb[0].mxu0 %v1768
        %v1770 = vpop.f32.mrb[0].mxu0
        %v1771 = vadd.f32 %v1640, %v1770
        %v1772 = vpop.f32.mrb[0].mxu0
        %1773 = vmatprep.mubr.f32.mxu0 0.0
        %v1774 = vand.u32 %v1356, 4294901760
        %v1775 = vsub.f32 %v1356, %v1774
        %1776 = vmatmul.mubr.f32.gmra.mrb[0].mxu0 %v1775
        %v1777 = vpop.f32.mrb[0].mxu0
        %v1778 = vadd.f32 %v1646, %v1777
        %v1779 = vpop.f32.mrb[0].mxu0
        %1780 = vmatprep.mubr.f32.mxu0 0.0
        %v1781 = vand.u32 %v1359, 4294901760
        %v1782 = vsub.f32 %v1359, %v1781
        %1783 = vmatmul.mubr.f32.gmra.mrb[0].mxu0 %v1782
        %v1784 = vpop.f32.mrb[0].mxu0
        %v1785 = vadd.f32 %v1652, %v1784
        %v1786 = vpop.f32.mrb[0].mxu0
        %1787 = vmatprep.mubr.f32.mxu0 0.0
        %v1788 = vand.u32 %v1362, 4294901760
        %v1789 = vsub.f32 %v1362, %v1788
        %1790 = vmatmul.mubr.f32.gmra.mrb[0].mxu0 %v1789
        %v1791 = vpop.f32.mrb[0].mxu0
        %v1792 = vadd.f32 %v1658, %v1791
        %v1793 = vpop.f32.mrb[0].mxu0
        %1794 = vmatprep.mubr.f32.mxu0 0.0
        %v1795 = vand.u32 %v1365, 4294901760
        %v1796 = vsub.f32 %v1365, %v1795
        %1797 = vmatmul.mubr.f32.gmra.mrb[0].mxu0 %v1796
        %v1798 = vpop.f32.mrb[0].mxu0
        %v1799 = vadd.f32 %v1664, %v1798
        %v1800 = vpop.f32.mrb[0].mxu0
        %1801 = vmatprep.mubr.f32.mxu0 0.0
        %v1802 = vand.u32 %v1368, 4294901760
        %v1803 = vsub.f32 %v1368, %v1802
        %1804 = vmatmul.mubr.f32.gmra.mrb[0].mxu0 %v1803
        %v1805 = vpop.f32.mrb[0].mxu0
        %v1806 = vadd.f32 %v1670, %v1805
        %v1807 = vpop.f32.mrb[0].mxu0
        %1808 = vmatprep.mubr.f32.mxu0 0.0
        %v1809 = vand.u32 %v1371, 4294901760
        %v1810 = vsub.f32 %v1371, %v1809
        %1811 = vmatmul.mubr.f32.gmra.mrb[0].mxu0 %v1810
        %v1812 = vpop.f32.mrb[0].mxu0
        %v1813 = vadd.f32 %v1676, %v1812
        %v1814 = vpop.f32.mrb[0].mxu0
        %1815 = vdwg.mxu0
        %1816 = vmatprep.subr.mxu0 0.0
        %v1817 = vand.u32 %v471, 4294901760
        %1818 = vmatpush1.msra.mxu0 %v1817
        %1819 = vmatprep.subr.mxu0 0.0
        %v1820 = vand.u32 %v472, 4294901760
        %1821 = vmatpush1.msra.mxu0 %v1820
        %1822 = vmatprep.subr.mxu0 0.0
        %v1823 = vand.u32 %v473, 4294901760
        %1824 = vmatpush1.msra.mxu0 %v1823
        %1825 = vmatprep.subr.mxu0 0.0
        %v1826 = vand.u32 %v474, 4294901760
        %1827 = vmatpush1.msra.mxu0 %v1826
        %1828 = vmatprep.subr.mxu0 0.0
        %v1829 = vand.u32 %v475, 4294901760
        %1830 = vmatpush1.msra.mxu0 %v1829
        %1831 = vmatprep.subr.mxu0 0.0
        %v1832 = vand.u32 %v476, 4294901760
        %1833 = vmatpush1.msra.mxu0 %v1832
        %1834 = vmatprep.subr.mxu0 0.0
        %v1835 = vand.u32 %v477, 4294901760
        %1836 = vmatpush1.msra.mxu0 %v1835
        %1837 = vmatprep.subr.mxu0 0.0
        %v1838 = vand.u32 %v478, 4294901760
        %1839 = vmatpush1.msra.mxu0 %v1838
        %1840 = vmatprep.subr.mxu0 0.0
        %1841 = vmatpush1.msra.mxu0 0.0
        %1842 = vmatprep.subr.mxu0 0.0
        %1843 = vmatpush1.msra.mxu0 0.0
        %1844 = vmatprep.subr.mxu0 0.0
        %1845 = vmatpush1.msra.mxu0 0.0
        %1846 = vmatprep.subr.mxu0 0.0
        %1847 = vmatpush1.msra.mxu0 0.0
        %1848 = vmatprep.subr.mxu0 0.0
        %1849 = vmatpush1.msra.mxu0 0.0
        %1850 = vmatprep.subr.mxu0 0.0
        %1851 = vmatpush1.msra.mxu0 0.0
        %1852 = vmatprep.subr.mxu0 0.0
        %1853 = vmatpush1.msra.mxu0 0.0
        %1854 = vmatprep.subr.mxu0 0.0
        %1855 = vmatpush1.msra.mxu0 0.0
        %1856 = vmatprep.subr.mxu0 0.0
        %1857 = vmatpush1.msra.mxu0 0.0
        %1858 = vmatprep.subr.mxu0 0.0
        %1859 = vmatpush1.msra.mxu0 0.0
        %1860 = vmatprep.subr.mxu0 0.0
        %1861 = vmatpush1.msra.mxu0 0.0
        %1862 = vmatprep.subr.mxu0 0.0
        %1863 = vmatpush1.msra.mxu0 0.0
        %1864 = vmatprep.subr.mxu0 0.0
        %1865 = vmatpush1.msra.mxu0 0.0
        %1866 = vmatprep.subr.mxu0 0.0
        %1867 = vmatpush1.msra.mxu0 0.0
        %1868 = vmatprep.subr.mxu0 0.0
        %1869 = vmatpush1.msra.mxu0 0.0
        %1870 = vmatprep.subr.mxu0 0.0
        %1871 = vmatpush1.msra.mxu0 0.0
        %1872 = vmatprep.subr.mxu0 0.0
        %1873 = vmatpush1.msra.mxu0 0.0
        %1874 = vmatprep.subr.mxu0 0.0
        %1875 = vmatpush1.msra.mxu0 0.0
        %1876 = vmatprep.subr.mxu0 0.0
        %1877 = vmatpush1.msra.mxu0 0.0
        %1878 = vmatprep.subr.mxu0 0.0
        %1879 = vmatpush1.msra.mxu0 0.0
        %1880 = vmatprep.subr.mxu0 0.0
        %1881 = vmatpush1.msra.mxu0 0.0
        %1882 = vmatprep.subr.mxu0 0.0
        %1883 = vmatpush1.msra.mxu0 0.0
        %1884 = vmatprep.subr.mxu0 0.0
        %1885 = vmatpush1.msra.mxu0 0.0
        %1886 = vmatprep.subr.mxu0 0.0
        %1887 = vmatpush1.msra.mxu0 0.0
        %1888 = vmatprep.mubr.f32.mxu0 0.0
        %v1889 = vand.u32 %v1350, 4294901760
        %v1890 = vsub.f32 %v1350, %v1889
        %v1891 = vand.u32 %v1890, 4294901760
        %1892 = vmatmul.mubr.f32.gmra.mrb[0].mxu0 %v1891
        %v1893 = vpop.f32.mrb[0].mxu0
        %v1894 = vadd.f32 %v1764, %v1893
        %v1895 = vpop.f32.mrb[0].mxu0
        %1896 = vmatprep.mubr.f32.mxu0 0.0
        %v1897 = vand.u32 %v1353, 4294901760
        %v1898 = vsub.f32 %v1353, %v1897
        %v1899 = vand.u32 %v1898, 4294901760
        %1900 = vmatmul.mubr.f32.gmra.mrb[0].mxu0 %v1899
        %v1901 = vpop.f32.mrb[0].mxu0
        %v1902 = vadd.f32 %v1771, %v1901
        %v1903 = vpop.f32.mrb[0].mxu0
        %1904 = vmatprep.mubr.f32.mxu0 0.0
        %v1905 = vand.u32 %v1356, 4294901760
        %v1906 = vsub.f32 %v1356, %v1905
        %v1907 = vand.u32 %v1906, 4294901760
        %1908 = vmatmul.mubr.f32.gmra.mrb[0].mxu0 %v1907
        %v1909 = vpop.f32.mrb[0].mxu0
        %v1910 = vadd.f32 %v1778, %v1909
        %v1911 = vpop.f32.mrb[0].mxu0
        %1912 = vmatprep.mubr.f32.mxu0 0.0
        %v1913 = vand.u32 %v1359, 4294901760
        %v1914 = vsub.f32 %v1359, %v1913
        %v1915 = vand.u32 %v1914, 4294901760
        %1916 = vmatmul.mubr.f32.gmra.mrb[0].mxu0 %v1915
        %v1917 = vpop.f32.mrb[0].mxu0
        %v1918 = vadd.f32 %v1785, %v1917
        %v1919 = vpop.f32.mrb[0].mxu0
        %1920 = vmatprep.mubr.f32.mxu0 0.0
        %v1921 = vand.u32 %v1362, 4294901760
        %v1922 = vsub.f32 %v1362, %v1921
        %v1923 = vand.u32 %v1922, 4294901760
        %1924 = vmatmul.mubr.f32.gmra.mrb[0].mxu0 %v1923
        %v1925 = vpop.f32.mrb[0].mxu0
        %v1926 = vadd.f32 %v1792, %v1925
        %v1927 = vpop.f32.mrb[0].mxu0
        %1928 = vmatprep.mubr.f32.mxu0 0.0
        %v1929 = vand.u32 %v1365, 4294901760
        %v1930 = vsub.f32 %v1365, %v1929
        %v1931 = vand.u32 %v1930, 4294901760
        %1932 = vmatmul.mubr.f32.gmra.mrb[0].mxu0 %v1931
        %v1933 = vpop.f32.mrb[0].mxu0
        %v1934 = vadd.f32 %v1799, %v1933
        %v1935 = vpop.f32.mrb[0].mxu0
        %1936 = vmatprep.mubr.f32.mxu0 0.0
        %v1937 = vand.u32 %v1368, 4294901760
        %v1938 = vsub.f32 %v1368, %v1937
        %v1939 = vand.u32 %v1938, 4294901760
        %1940 = vmatmul.mubr.f32.gmra.mrb[0].mxu0 %v1939
        %v1941 = vpop.f32.mrb[0].mxu0
        %v1942 = vadd.f32 %v1806, %v1941
        %v1943 = vpop.f32.mrb[0].mxu0
        %1944 = vmatprep.mubr.f32.mxu0 0.0
        %v1945 = vand.u32 %v1371, 4294901760
        %v1946 = vsub.f32 %v1371, %v1945
        %v1947 = vand.u32 %v1946, 4294901760
        %1948 = vmatmul.mubr.f32.gmra.mrb[0].mxu0 %v1947
        %v1949 = vpop.f32.mrb[0].mxu0
        %v1950 = vadd.f32 %v1813, %v1949
        %v1951 = vpop.f32.mrb[0].mxu0
        %1952 = vdwg.mxu0
        %1953 = vmatprep.subr.mxu0 0.0
        %v1954 = vand.u32 %v471, 4294901760
        %v1955 = vsub.f32 %v471, %v1954
        %v1956 = vand.u32 %v1955, 4294901760
        %1957 = vmatpush1.msra.mxu0 %v1956
        %1958 = vmatprep.subr.mxu0 0.0
        %v1959 = vand.u32 %v472, 4294901760
        %v1960 = vsub.f32 %v472, %v1959
        %v1961 = vand.u32 %v1960, 4294901760
        %1962 = vmatpush1.msra.mxu0 %v1961
        %1963 = vmatprep.subr.mxu0 0.0
        %v1964 = vand.u32 %v473, 4294901760
        %v1965 = vsub.f32 %v473, %v1964
        %v1966 = vand.u32 %v1965, 4294901760
        %1967 = vmatpush1.msra.mxu0 %v1966
        %1968 = vmatprep.subr.mxu0 0.0
        %v1969 = vand.u32 %v474, 4294901760
        %v1970 = vsub.f32 %v474, %v1969
        %v1971 = vand.u32 %v1970, 4294901760
        %1972 = vmatpush1.msra.mxu0 %v1971
        %1973 = vmatprep.subr.mxu0 0.0
        %v1974 = vand.u32 %v475, 4294901760
        %v1975 = vsub.f32 %v475, %v1974
        %v1976 = vand.u32 %v1975, 4294901760
        %1977 = vmatpush1.msra.mxu0 %v1976
        %1978 = vmatprep.subr.mxu0 0.0
        %v1979 = vand.u32 %v476, 4294901760
        %v1980 = vsub.f32 %v476, %v1979
        %v1981 = vand.u32 %v1980, 4294901760
        %1982 = vmatpush1.msra.mxu0 %v1981
        %1983 = vmatprep.subr.mxu0 0.0
        %v1984 = vand.u32 %v477, 4294901760
        %v1985 = vsub.f32 %v477, %v1984
        %v1986 = vand.u32 %v1985, 4294901760
        %1987 = vmatpush1.msra.mxu0 %v1986
        %1988 = vmatprep.subr.mxu0 0.0
        %v1989 = vand.u32 %v478, 4294901760
        %v1990 = vsub.f32 %v478, %v1989
        %v1991 = vand.u32 %v1990, 4294901760
        %1992 = vmatpush1.msra.mxu0 %v1991
        %1993 = vmatprep.subr.mxu0 0.0
        %1994 = vmatpush1.msra.mxu0 0.0
        %1995 = vmatprep.subr.mxu0 0.0
        %1996 = vmatpush1.msra.mxu0 0.0
        %1997 = vmatprep.subr.mxu0 0.0
        %1998 = vmatpush1.msra.mxu0 0.0
        %1999 = vmatprep.subr.mxu0 0.0
        %2000 = vmatpush1.msra.mxu0 0.0
        %2001 = vmatprep.subr.mxu0 0.0
        %2002 = vmatpush1.msra.mxu0 0.0
        %2003 = vmatprep.subr.mxu0 0.0
        %2004 = vmatpush1.msra.mxu0 0.0
        %2005 = vmatprep.subr.mxu0 0.0
        %2006 = vmatpush1.msra.mxu0 0.0
        %2007 = vmatprep.subr.mxu0 0.0
        %2008 = vmatpush1.msra.mxu0 0.0
        %2009 = vmatprep.subr.mxu0 0.0
        %2010 = vmatpush1.msra.mxu0 0.0
        %2011 = vmatprep.subr.mxu0 0.0
        %2012 = vmatpush1.msra.mxu0 0.0
        %2013 = vmatprep.subr.mxu0 0.0
        %2014 = vmatpush1.msra.mxu0 0.0
        %2015 = vmatprep.subr.mxu0 0.0
        %2016 = vmatpush1.msra.mxu0 0.0
        %2017 = vmatprep.subr.mxu0 0.0
        %2018 = vmatpush1.msra.mxu0 0.0
        %2019 = vmatprep.subr.mxu0 0.0
        %2020 = vmatpush1.msra.mxu0 0.0
        %2021 = vmatprep.subr.mxu0 0.0
        %2022 = vmatpush1.msra.mxu0 0.0
        %2023 = vmatprep.subr.mxu0 0.0
        %2024 = vmatpush1.msra.mxu0 0.0
        %2025 = vmatprep.subr.mxu0 0.0
        %2026 = vmatpush1.msra.mxu0 0.0
        %2027 = vmatprep.subr.mxu0 0.0
        %2028 = vmatpush1.msra.mxu0 0.0
        %2029 = vmatprep.subr.mxu0 0.0
        %2030 = vmatpush1.msra.mxu0 0.0
        %2031 = vmatprep.subr.mxu0 0.0
        %2032 = vmatpush1.msra.mxu0 0.0
        %2033 = vmatprep.subr.mxu0 0.0
        %2034 = vmatpush1.msra.mxu0 0.0
        %2035 = vmatprep.subr.mxu0 0.0
        %2036 = vmatpush1.msra.mxu0 0.0
        %2037 = vmatprep.subr.mxu0 0.0
        %2038 = vmatpush1.msra.mxu0 0.0
        %2039 = vmatprep.subr.mxu0 0.0
        %2040 = vmatpush1.msra.mxu0 0.0
        %2041 = vmatprep.mubr.f32.mxu0 0.0
        %v2042 = vand.u32 %v1350, 4294901760
        %2043 = vmatmul.mubr.f32.gmra.mrb[0].mxu0 %v2042
        %v2044 = vpop.f32.mrb[0].mxu0
        %v2045 = vadd.f32 %v1894, %v2044
        %v2046 = vpop.f32.mrb[0].mxu0
        %2047 = vmatprep.mubr.f32.mxu0 0.0
        %v2048 = vand.u32 %v1353, 4294901760
        %2049 = vmatmul.mubr.f32.gmra.mrb[0].mxu0 %v2048
        %v2050 = vpop.f32.mrb[0].mxu0
        %v2051 = vadd.f32 %v1902, %v2050
        %v2052 = vpop.f32.mrb[0].mxu0
        %2053 = vmatprep.mubr.f32.mxu0 0.0
        %v2054 = vand.u32 %v1356, 4294901760
        %2055 = vmatmul.mubr.f32.gmra.mrb[0].mxu0 %v2054
        %v2056 = vpop.f32.mrb[0].mxu0
        %v2057 = vadd.f32 %v1910, %v2056
        %v2058 = vpop.f32.mrb[0].mxu0
        %2059 = vmatprep.mubr.f32.mxu0 0.0
        %v2060 = vand.u32 %v1359, 4294901760
        %2061 = vmatmul.mubr.f32.gmra.mrb[0].mxu0 %v2060
        %v2062 = vpop.f32.mrb[0].mxu0
        %v2063 = vadd.f32 %v1918, %v2062
        %v2064 = vpop.f32.mrb[0].mxu0
        %2065 = vmatprep.mubr.f32.mxu0 0.0
        %v2066 = vand.u32 %v1362, 4294901760
        %2067 = vmatmul.mubr.f32.gmra.mrb[0].mxu0 %v2066
        %v2068 = vpop.f32.mrb[0].mxu0
        %v2069 = vadd.f32 %v1926, %v2068
        %v2070 = vpop.f32.mrb[0].mxu0
        %2071 = vmatprep.mubr.f32.mxu0 0.0
        %v2072 = vand.u32 %v1365, 4294901760
        %2073 = vmatmul.mubr.f32.gmra.mrb[0].mxu0 %v2072
        %v2074 = vpop.f32.mrb[0].mxu0
        %v2075 = vadd.f32 %v1934, %v2074
        %v2076 = vpop.f32.mrb[0].mxu0
        %2077 = vmatprep.mubr.f32.mxu0 0.0
        %v2078 = vand.u32 %v1368, 4294901760
        %2079 = vmatmul.mubr.f32.gmra.mrb[0].mxu0 %v2078
        %v2080 = vpop.f32.mrb[0].mxu0
        %v2081 = vadd.f32 %v1942, %v2080
        %v2082 = vpop.f32.mrb[0].mxu0
        %2083 = vmatprep.mubr.f32.mxu0 0.0
        %v2084 = vand.u32 %v1371, 4294901760
        %2085 = vmatmul.mubr.f32.gmra.mrb[0].mxu0 %v2084
        %v2086 = vpop.f32.mrb[0].mxu0
        %v2087 = vadd.f32 %v1950, %v2086
        %v2088 = vpop.f32.mrb[0].mxu0
        %2089 = vdwg.mxu0
        %2090 = vmatprep.subr.mxu0 0.0
        %v2091 = vand.u32 %v471, 4294901760
        %2092 = vmatpush1.msra.mxu0 %v2091
        %2093 = vmatprep.subr.mxu0 0.0
        %v2094 = vand.u32 %v472, 4294901760
        %2095 = vmatpush1.msra.mxu0 %v2094
        %2096 = vmatprep.subr.mxu0 0.0
        %v2097 = vand.u32 %v473, 4294901760
        %2098 = vmatpush1.msra.mxu0 %v2097
        %2099 = vmatprep.subr.mxu0 0.0
        %v2100 = vand.u32 %v474, 4294901760
        %2101 = vmatpush1.msra.mxu0 %v2100
        %2102 = vmatprep.subr.mxu0 0.0
        %v2103 = vand.u32 %v475, 4294901760
        %2104 = vmatpush1.msra.mxu0 %v2103
        %2105 = vmatprep.subr.mxu0 0.0
        %v2106 = vand.u32 %v476, 4294901760
        %2107 = vmatpush1.msra.mxu0 %v2106
        %2108 = vmatprep.subr.mxu0 0.0
        %v2109 = vand.u32 %v477, 4294901760
        %2110 = vmatpush1.msra.mxu0 %v2109
        %2111 = vmatprep.subr.mxu0 0.0
        %v2112 = vand.u32 %v478, 4294901760
        %2113 = vmatpush1.msra.mxu0 %v2112
        %2114 = vmatprep.subr.mxu0 0.0
        %2115 = vmatpush1.msra.mxu0 0.0
        %2116 = vmatprep.subr.mxu0 0.0
        %2117 = vmatpush1.msra.mxu0 0.0
        %2118 = vmatprep.subr.mxu0 0.0
        %2119 = vmatpush1.msra.mxu0 0.0
        %2120 = vmatprep.subr.mxu0 0.0
        %2121 = vmatpush1.msra.mxu0 0.0
        %2122 = vmatprep.subr.mxu0 0.0
        %2123 = vmatpush1.msra.mxu0 0.0
        %2124 = vmatprep.subr.mxu0 0.0
        %2125 = vmatpush1.msra.mxu0 0.0
        %2126 = vmatprep.subr.mxu0 0.0
        %2127 = vmatpush1.msra.mxu0 0.0
        %2128 = vmatprep.subr.mxu0 0.0
        %2129 = vmatpush1.msra.mxu0 0.0
        %2130 = vmatprep.subr.mxu0 0.0
        %2131 = vmatpush1.msra.mxu0 0.0
        %2132 = vmatprep.subr.mxu0 0.0
        %2133 = vmatpush1.msra.mxu0 0.0
        %2134 = vmatprep.subr.mxu0 0.0
        %2135 = vmatpush1.msra.mxu0 0.0
        %2136 = vmatprep.subr.mxu0 0.0
        %2137 = vmatpush1.msra.mxu0 0.0
        %2138 = vmatprep.subr.mxu0 0.0
        %2139 = vmatpush1.msra.mxu0 0.0
        %2140 = vmatprep.subr.mxu0 0.0
        %2141 = vmatpush1.msra.mxu0 0.0
        %2142 = vmatprep.subr.mxu0 0.0
        %2143 = vmatpush1.msra.mxu0 0.0
        %2144 = vmatprep.subr.mxu0 0.0
        %2145 = vmatpush1.msra.mxu0 0.0
        %2146 = vmatprep.subr.mxu0 0.0
        %2147 = vmatpush1.msra.mxu0 0.0
        %2148 = vmatprep.subr.mxu0 0.0
        %2149 = vmatpush1.msra.mxu0 0.0
        %2150 = vmatprep.subr.mxu0 0.0
        %2151 = vmatpush1.msra.mxu0 0.0
        %2152 = vmatprep.subr.mxu0 0.0
        %2153 = vmatpush1.msra.mxu0 0.0
        %2154 = vmatprep.subr.mxu0 0.0
        %2155 = vmatpush1.msra.mxu0 0.0
        %2156 = vmatprep.subr.mxu0 0.0
        %2157 = vmatpush1.msra.mxu0 0.0
        %2158 = vmatprep.subr.mxu0 0.0
        %2159 = vmatpush1.msra.mxu0 0.0
        %2160 = vmatprep.subr.mxu0 0.0
        %2161 = vmatpush1.msra.mxu0 0.0
        %2162 = vmatprep.mubr.f32.mxu0 0.0
        %v2163 = vand.u32 %v1350, 4294901760
        %2164 = vmatmul.mubr.f32.gmra.mrb[0].mxu0 %v2163
        %v2165 = vpop.f32.mrb[0].mxu0
        %v2166 = vadd.f32 %v2045, %v2165
        %v2167 = vpop.f32.mrb[0].mxu0
        %2168 = vmatprep.mubr.f32.mxu0 0.0
        %v2169 = vand.u32 %v1353, 4294901760
        %2170 = vmatmul.mubr.f32.gmra.mrb[0].mxu0 %v2169
        %v2171 = vpop.f32.mrb[0].mxu0
        %v2172 = vadd.f32 %v2051, %v2171
        %v2173 = vpop.f32.mrb[0].mxu0
        %2174 = vmatprep.mubr.f32.mxu0 0.0
        %v2175 = vand.u32 %v1356, 4294901760
        %2176 = vmatmul.mubr.f32.gmra.mrb[0].mxu0 %v2175
        %v2177 = vpop.f32.mrb[0].mxu0
        %v2178 = vadd.f32 %v2057, %v2177
        %v2179 = vpop.f32.mrb[0].mxu0
        %2180 = vmatprep.mubr.f32.mxu0 0.0
        %v2181 = vand.u32 %v1359, 4294901760
        %2182 = vmatmul.mubr.f32.gmra.mrb[0].mxu0 %v2181
        %v2183 = vpop.f32.mrb[0].mxu0
        %v2184 = vadd.f32 %v2063, %v2183
        %v2185 = vpop.f32.mrb[0].mxu0
        %2186 = vmatprep.mubr.f32.mxu0 0.0
        %v2187 = vand.u32 %v1362, 4294901760
        %2188 = vmatmul.mubr.f32.gmra.mrb[0].mxu0 %v2187
        %v2189 = vpop.f32.mrb[0].mxu0
        %v2190 = vadd.f32 %v2069, %v2189
        %v2191 = vpop.f32.mrb[0].mxu0
        %2192 = vmatprep.mubr.f32.mxu0 0.0
        %v2193 = vand.u32 %v1365, 4294901760
        %2194 = vmatmul.mubr.f32.gmra.mrb[0].mxu0 %v2193
        %v2195 = vpop.f32.mrb[0].mxu0
        %v2196 = vadd.f32 %v2075, %v2195
        %v2197 = vpop.f32.mrb[0].mxu0
        %2198 = vmatprep.mubr.f32.mxu0 0.0
        %v2199 = vand.u32 %v1368, 4294901760
        %2200 = vmatmul.mubr.f32.gmra.mrb[0].mxu0 %v2199
        %v2201 = vpop.f32.mrb[0].mxu0
        %v2202 = vadd.f32 %v2081, %v2201
        %v2203 = vpop.f32.mrb[0].mxu0
        %2204 = vmatprep.mubr.f32.mxu0 0.0
        %v2205 = vand.u32 %v1371, 4294901760
        %2206 = vmatmul.mubr.f32.gmra.mrb[0].mxu0 %v2205
        %v2207 = vpop.f32.mrb[0].mxu0
        %v2208 = vadd.f32 %v2087, %v2207
        %v2209 = vpop.f32.mrb[0].mxu0
        %2210 = vdwg.mxu0
        %v2211 = vld [vmem:[%s3] sm:$0x1]
        %v2213 = vlaneseq
        %v2214 = vshrl.u32 %v2213, 7
        %v2215 = vsub.s32 0, %v2214
        %v2216 = vrot.slane %v2211, %v2215
        %v2218 = vmul.f32 %v351, %v2216
        %v2219 = vmul.f32 %v352, %v2216
        %v2220 = vmul.f32 %v353, %v2216
        %v2221 = vmul.f32 %v354, %v2216
        %v2222 = vmul.f32 %v355, %v2216
        %v2223 = vmul.f32 %v356, %v2216
        %v2224 = vmul.f32 %v357, %v2216
        %v2225 = vmul.f32 %v358, %v2216
        %v2226 = vsub.f32 %v2166, %v2218
        %v2227 = vsub.f32 %v2172, %v2219
        %v2228 = vsub.f32 %v2178, %v2220
        %v2229 = vsub.f32 %v2184, %v2221
        %v2230 = vsub.f32 %v2190, %v2222
        %v2231 = vsub.f32 %v2196, %v2223
        %v2232 = vsub.f32 %v2202, %v2224
        %v2233 = vsub.f32 %v2208, %v2225
        %v2234 = vmul.f32 %v463, %v2226
        %v2235 = vmul.f32 %v464, %v2227
        %v2236 = vmul.f32 %v465, %v2228
        %v2237 = vmul.f32 %v466, %v2229
        %v2238 = vmul.f32 %v467, %v2230
        %v2239 = vmul.f32 %v468, %v2231
        %v2240 = vmul.f32 %v469, %v2232
        %v2241 = vmul.f32 %v470, %v2233
        %v2242 = vld [vmem:[%s4] sm:$0x1]
        %v2244 = vlaneseq
        %v2245 = vshrl.u32 %v2244, 7
        %v2246 = vsub.s32 0, %v2245
        %v2247 = vrot.slane %v2242, %v2246
        %v2249 = vadd.f32 %v2234, %v2247
        %v2250 = vadd.f32 %v2235, %v2247
        %v2251 = vadd.f32 %v2236, %v2247
        %v2252 = vadd.f32 %v2237, %v2247
        %v2253 = vadd.f32 %v2238, %v2247
        %v2254 = vadd.f32 %v2239, %v2247
        %v2255 = vadd.f32 %v2240, %v2247
        %v2256 = vadd.f32 %v2241, %v2247
        %2257 = vst.msk [vmem:[%s275] sm:$0xff] %vm294, %v2249
        %2258 = vst.msk [vmem:[%s275 + $0x8] sm:$0xff] %vm294, %v2250
        %2259 = vst.msk [vmem:[%s275 + $0x10] sm:$0xff] %vm294, %v2251
        %2260 = vst.msk [vmem:[%s275 + $0x18] sm:$0xff] %vm294, %v2252
        %2261 = vst.msk [vmem:[%s275 + $0x20] sm:$0xff] %vm294, %v2253
        %2262 = vst.msk [vmem:[%s275 + $0x28] sm:$0xff] %vm294, %v2254
        %2263 = vst.msk [vmem:[%s275 + $0x30] sm:$0xff] %vm294, %v2255
        %2264 = vst.msk [vmem:[%s275 + $0x38] sm:$0xff] %vm294, %v2256
        %s2265 = smul.u32 8, %s20
        %p2266 = scmp.lt.s32.totalorder %s2265, 15
        %s2267 = scalar_select %p2266, %s2265, 15
        %s2268 = smul.addr %s2267, 8
        %s2269 = scalar_lea.vmem %s5, %s2268
        // Predicated region
        $region53: #{tpu_custom_call.1} parent=39 // pred_check
          %p2270 = pneg %p148
        $region54: #{tpu_custom_call.1} parent=39 // pred_check_branch
          %2272 = sbr.rel (%p2270) target = $region56
        $region55: #{tpu_custom_call.1} parent=39 // pred_region
          %s2273 = smul.u32 8, %s20
        $region56: #{tpu_custom_call.1} parent=39 // pred_fallthru
          _
      $region40: #{tpu_custom_call.1} parent=5 // pred_fallthru
        _
      %p2274 = scmp.le.s32.totalorder 2, %s15
      // Predicated region
      $region57: #{tpu_custom_call.1} parent=5 // pred_check
        %p2275 = pneg %p2274
      $region58: #{tpu_custom_call.1} parent=5 // pred_check_branch
        %2277 = sbr.rel (%p2275) target = $region60
      $region59: #{tpu_custom_call.1} parent=5 // pred_region
        %s2278 = ssub.s32 %s15, 2
        // Predicated region
        $region61: #{tpu_custom_call.1} parent=59 // pred_check
          %p2279 = pneg %p154
        $region62: #{tpu_custom_call.1} parent=59 // pred_check_branch
          %2281 = sbr.rel (%p2279) target = $region64
        $region63: #{tpu_custom_call.1} parent=59 // pred_region
          %s2282 = smul.u32 8, %s21
          %p2283 = scmp.lt.s32.totalorder %s2282, 15
          %s2284 = scalar_select %p2283, %s2282, 15
          %s2285 = smul.addr %s2284, 8
          %s2286 = scalar_lea.vmem %s5, %s2285
        $region64: #{tpu_custom_call.1} parent=59 // pred_fallthru
          _
      $region60: #{tpu_custom_call.1} parent=5 // pred_fallthru
        _
    $region6: #{tpu_custom_call.1} parent=1 // loop_footer
      %s19 = sadd.s32 1, %s15
    $region7: #{tpu_custom_call.1} parent=1 // loop_footer_branch
      %14 = sbr.rel target = $region3
    $region8: #{tpu_custom_call.1} parent=1 // loop_exit
      _
    %2287 = vsyncpa [#allocation3], 1
    %s2288 = scalar_lea.sflag [#allocation3], 1
    %2289 = vsyncpa %s2288, 1
    %2290 = vsyncpa [#allocation5], 1

</llo_original>
